<compile_context>
chip_gen: v5e
topology: v5e:2x2
jax: 0.10.0
libtpu: 0.0.40
codegen_flags: <defaults>
</compile_context>

<pallas_src>
import functools
import math

import jax
import jax.numpy as jnp
from jax.experimental import pallas as pl
from jax.experimental.pallas import tpu as pltpu

BN_EPS = 1e-5
CPAD = 128          # lane-padded channel width carried through the pipeline
NEG_BIG = -1e30     # mask value for the per-node edge softmax

_VMEM = pl.BlockSpec(memory_space=pltpu.MemorySpace.VMEM)


# --------------------------------------------------------------------------
# Fused kernel: Linear -> (TransformerConv, BN+ReLU) x2 -> TransformerConv
# --------------------------------------------------------------------------
def _gcn_encoder_kernel(dst_ref, src_ref, x_ref, lin_w_ref, lin_b_ref,
                        w1_ref, w2_ref, w3_ref, cb_ref, bn_g_ref, bn_b_ref,
                        out_ref, *, conv_in, conv_out):
    n = x_ref.shape[0]
    e = dst_ref.shape[1]
    f32 = jnp.float32
    bf16 = jnp.bfloat16

    # ---- dense adjacency with edge multiplicities + self loops (on MXU) ----
    # One-hots are built already in the orientation needed for a canonical
    # (N,E) @ (E,N) dot -> no operand relayout/transpose on the critical path.
    dst_row = dst_ref[...]                                            # (1, E)
    src_col = src_ref[...]                                            # (E, 1)
    dst_onehot = (jax.lax.broadcasted_iota(jnp.int32, (n, e), 0)
                  == dst_row).astype(bf16)                            # (N, E)
    src_onehot = (jax.lax.broadcasted_iota(jnp.int32, (e, n), 1)
                  == src_col).astype(bf16)                            # (E, N)
    # adj[i, j] = #edges e with dst[e]==i and src[e]==j  (messages j -> i);
    # bf16 0/1 operands with f32 accumulation -> exact integer counts.
    adj = jnp.dot(dst_onehot, src_onehot, preferred_element_type=f32)  # (N, N)
    row_i = jax.lax.broadcasted_iota(jnp.int32, (n, n), 0)
    col_i = jax.lax.broadcasted_iota(jnp.int32, (n, n), 1)
    adj = adj + (row_i == col_i).astype(f32)                          # self loops
    edge_mask = adj > 0.0

    def transformer_conv(h, w_ref, bias, cin, cout):
        # ONE fused projection matmul: [q | k | v | skip] in 4*CPAD lanes.
        proj = jnp.dot(h[:, :cin].astype(bf16), w_ref[...],
                       preferred_element_type=f32) + bias             # (N, 512)
        q = proj[:, 0 * CPAD:1 * CPAD]
        k = proj[:, 1 * CPAD:2 * CPAD]
        v = proj[:, 2 * CPAD:3 * CPAD]
        skip = proj[:, 3 * CPAD:4 * CPAD]
        # scores[i, j] = q_i . k_j / sqrt(C_out)  (padded lanes are zero)
        scores = jax.lax.dot_general(q.astype(bf16), k.astype(bf16),
                                     (((1,), (1,)), ((), ())),
                                     preferred_element_type=f32)
        scores = scores * f32(1.0 / math.sqrt(cout))
        masked = jnp.where(edge_mask, scores, f32(NEG_BIG))
        row_max = jnp.max(masked, axis=-1, keepdims=True)   # over edges only
        w_att = adj * jnp.exp(masked - row_max)    # multiplicity-exact softmax
        denom = jnp.sum(w_att, axis=-1, keepdims=True)       # >= 1 (self loop)
        agg = jnp.dot(w_att.astype(bf16), v.astype(bf16),
                      preferred_element_type=f32)
        # divide -> EUP reciprocal on a (N,1) column + cheap broadcast multiply
        return agg * pl.reciprocal(denom, approx=True) + skip

    ones_over_n = jnp.full((1, n), 1.0 / n, f32)

    def bn_relu(h, layer):
        # training-mode batch stats in a single (1,N)@(N,2*CPAD) MXU pass
        stats = jnp.dot(ones_over_n, jnp.concatenate([h, h * h], axis=1),
                        preferred_element_type=f32)                   # (1, 2C)
        mean, ex2 = stats[:, :CPAD], stats[:, CPAD:]
        var = jnp.maximum(ex2 - mean * mean, 0.0)         # biased variance
        hn = bn_g_ref[layer] * (h - mean) * jax.lax.rsqrt(var + BN_EPS)
        hn = hn + bn_b_ref[layer]
        return jnp.maximum(hn, 0.0)

    # ---- pipeline -----------------------------------------------------------
    h = jnp.dot(x_ref[...].astype(bf16), lin_w_ref[...],
                preferred_element_type=f32) + lin_b_ref[...]   # Linear(In, 2*Out)
    h = transformer_conv(h, w1_ref, cb_ref[0], conv_in[0], conv_out[0])  # 4*Out
    h = bn_relu(h, 0)
    h = transformer_conv(h, w2_ref, cb_ref[1], conv_in[1], conv_out[1])  # 2*Out
    h = bn_relu(h, 1)
    h = transformer_conv(h, w3_ref, cb_ref[2], conv_in[2], conv_out[2])  # 2*Out
    out_ref[...] = h           # lane-dense 128-wide slab; wrapper slices c_final


# --------------------------------------------------------------------------
# Wrapper
# --------------------------------------------------------------------------
def make_forward(in_ch, out_ch):
    c2, c4 = 2 * out_ch, 4 * out_ch
    kernel = functools.partial(_gcn_encoder_kernel,
                               conv_in=(c2, c4, c2),
                               conv_out=(c4, c2, c2))

    def forward(params, x, edge_index):
        n = x.shape[0]
        e = edge_index.shape[1]
        dst_row = edge_index[1].reshape(1, e).astype(jnp.int32)   # (1, E)
        src_col = edge_index[0].reshape(e, 1).astype(jnp.int32)   # (E, 1)
        out_pad = pl.pallas_call(
            kernel,
            out_shape=jax.ShapeDtypeStruct((n, CPAD), jnp.float32),
            in_specs=[_VMEM] * 11,
            out_specs=_VMEM,
        )(dst_row, src_col, x.astype(jnp.float32),
          params["lin_w"], params["lin_b"],
          params["conv1_w"], params["conv2_w"], params["conv3_w"],
          params["conv_b"], params["bn_g"], params["bn_b"])
        return out_pad[:, :c2]          # free XLA slice outside the kernel

    return forward


# --------------------------------------------------------------------------
# Parameter init (deterministic, synthetic)
# Weights: compact input rows, output lanes padded to 128 per projection,
# q/k/v/skip concatenated to 4*CPAD lanes, stored bf16 (DMA-light).
# --------------------------------------------------------------------------
def _lin_init(key, din, dout):
    kw, kb = jax.random.split(key)
    bound = 1.0 / math.sqrt(din)
    w = jax.random.uniform(kw, (din, dout), jnp.float32, -bound, bound)
    b = jax.random.uniform(kb, (1, dout), jnp.float32, -bound, bound)
    return w, b


def _fused_conv_params(keys, cin, cout):
    ws, bs = [], []
    for t in range(4):                              # Wq, Wk, Wv, Wskip
        w, b = _lin_init(keys[t], cin, cout)
        ws.append(jnp.zeros((cin, CPAD), jnp.float32).at[:, :cout].set(w))
        bs.append(jnp.zeros((1, CPAD), jnp.float32).at[:, :cout].set(b))
    w_fused = jnp.concatenate(ws, axis=1).astype(jnp.bfloat16)   # (cin, 4*CPAD)
    b_fused = jnp.concatenate(bs, axis=1)                        # (1, 4*CPAD) f32
    return w_fused, b_fused


def init_params(key, in_ch, out_ch):
    c2, c4 = 2 * out_ch, 4 * out_ch
    conv_dims = ((c2, c4), (c4, c2), (c2, c2))      # (in, out) for conv1..3

    keys = jax.random.split(key, 1 + 4 * len(conv_dims))
    lin_w, lin_b = _lin_init(keys[0], in_ch, c2)
    lin_w_p = jnp.zeros((in_ch, CPAD), jnp.float32).at[:, :c2].set(lin_w)
    lin_b_p = jnp.zeros((1, CPAD), jnp.float32).at[:, :c2].set(lin_b)

    conv_ws, conv_bs = [], []
    for li, (cin, cout) in enumerate(conv_dims):
        w, b = _fused_conv_params(keys[1 + 4 * li: 1 + 4 * (li + 1)], cin, cout)
        conv_ws.append(w)
        conv_bs.append(b)

    bn_g = jnp.stack([jnp.zeros((1, CPAD), jnp.float32).at[:, :c4].set(1.0),
                      jnp.zeros((1, CPAD), jnp.float32).at[:, :c2].set(1.0)])
    bn_b = jnp.zeros((2, 1, CPAD), jnp.float32)
    # NOTE: bn3 exists in the module but forward() never uses it.

    return {
        "lin_w": lin_w_p.astype(jnp.bfloat16),   # (in_ch, CPAD)   bf16
        "lin_b": lin_b_p,                        # (1, CPAD)       f32
        "conv1_w": conv_ws[0],                   # (c2, 4*CPAD)    bf16
        "conv2_w": conv_ws[1],                   # (c4, 4*CPAD)    bf16
        "conv3_w": conv_ws[2],                   # (c2, 4*CPAD)    bf16
        "conv_b": jnp.stack(conv_bs),            # (3, 1, 4*CPAD)  f32
        "bn_g": bn_g,                            # (2, 1, CPAD)    f32
        "bn_b": bn_b,                            # (2, 1, CPAD)    f32
    }


# --------------------------------------------------------------------------
if __name__ == "__main__":
    key = jax.random.PRNGKey(0)
    k_x, k_e, k_w = jax.random.split(key, 3)

    N, IN_CH, OUT_CH, E = 64, 8, 16, 128

    x = jax.random.normal(k_x, (N, IN_CH), jnp.float32)
    edge_index = jax.random.randint(k_e, (2, E), 0, N, jnp.int32)
    params = init_params(k_w, IN_CH, OUT_CH)

    forward = jax.jit(make_forward(IN_CH, OUT_CH))
    out = jax.block_until_ready(forward(params, x, edge_index))

    assert out.shape == (N, 2 * OUT_CH)
    assert bool(jnp.all(jnp.isfinite(out)))
    print("KERNEL_OK")
</pallas_src>

<mosaic_0001>
module attributes {stable_mosaic.version = 11 : i64} {
  func.func @_gcn_encoder_kernel(%arg0: memref<1x128xi32, #tpu.memory_space<vmem>>, %arg1: memref<128x1xi32, #tpu.memory_space<vmem>>, %arg2: memref<64x8xf32, #tpu.memory_space<vmem>>, %arg3: memref<8x128xbf16, #tpu.memory_space<vmem>>, %arg4: memref<1x128xf32, #tpu.memory_space<vmem>>, %arg5: memref<32x512xbf16, #tpu.memory_space<vmem>>, %arg6: memref<64x512xbf16, #tpu.memory_space<vmem>>, %arg7: memref<32x512xbf16, #tpu.memory_space<vmem>>, %arg8: memref<3x1x512xf32, #tpu.memory_space<vmem>>, %arg9: memref<2x1x128xf32, #tpu.memory_space<vmem>>, %arg10: memref<2x1x128xf32, #tpu.memory_space<vmem>>, %arg11: memref<64x128xf32, #tpu.memory_space<vmem>>) attributes {dimension_semantics = [], scalar_prefetch = 0 : i64, scratch_operands = 0 : i64, tpu.core_type = #tpu.core_type<tc>} {
    %c0 = arith.constant 0 : index
    %c0_0 = arith.constant 0 : index
    %0 = vector.load %arg0[%c0, %c0_0] : memref<1x128xi32, #tpu.memory_space<vmem>>, vector<1x128xi32>
    %c0_1 = arith.constant 0 : index
    %c0_2 = arith.constant 0 : index
    %1 = vector.load %arg1[%c0_1, %c0_2] : memref<128x1xi32, #tpu.memory_space<vmem>>, vector<128x1xi32>
    %2 = tpu.iota {dimensions = array<i32: 0>} : vector<64x128xi32>
    %3 = vector.broadcast %0 : vector<1x128xi32> to vector<64x128xi32>
    %4 = arith.cmpi eq, %2, %3 : vector<64x128xi32>
    %5 = arith.extui %4 : vector<64x128xi1> to vector<64x128xi32>
    %6 = arith.sitofp %5 : vector<64x128xi32> to vector<64x128xf32>
    %7 = arith.truncf %6 : vector<64x128xf32> to vector<64x128xbf16>
    %8 = tpu.iota {dimensions = array<i32: 1>} : vector<128x64xi32>
    %9 = vector.broadcast %1 : vector<128x1xi32> to vector<128x64xi32>
    %10 = arith.cmpi eq, %8, %9 : vector<128x64xi32>
    %11 = arith.extui %10 : vector<128x64xi1> to vector<128x64xi32>
    %12 = arith.sitofp %11 : vector<128x64xi32> to vector<128x64xf32>
    %13 = arith.truncf %12 : vector<128x64xf32> to vector<128x64xbf16>
    %cst = arith.constant dense<0.000000e+00> : vector<64x64xf32>
    %14 = tpu.matmul %7, %13, %cst {dimension_numbers = #tpu.dot_dimension_numbers<[1], [0], [0], [1], [0, 0, 1, 1], [], []>} : vector<64x128xbf16>, vector<128x64xbf16>, vector<64x64xf32> -> vector<64x64xf32>
    %15 = tpu.iota {dimensions = array<i32: 0>} : vector<64x64xi32>
    %16 = tpu.iota {dimensions = array<i32: 1>} : vector<64x64xi32>
    %17 = arith.cmpi eq, %15, %16 : vector<64x64xi32>
    %18 = arith.extui %17 : vector<64x64xi1> to vector<64x64xi32>
    %19 = arith.sitofp %18 : vector<64x64xi32> to vector<64x64xf32>
    %20 = arith.addf %14, %19 : vector<64x64xf32>
    %cst_3 = arith.constant 0.000000e+00 : f32
    %21 = vector.broadcast %cst_3 : f32 to vector<64x64xf32>
    %22 = arith.cmpf ogt, %20, %21 : vector<64x64xf32>
    %cst_4 = arith.constant 1.562500e-02 : f32
    %23 = vector.broadcast %cst_4 : f32 to vector<1x64xf32>
    %c0_5 = arith.constant 0 : index
    %c0_6 = arith.constant 0 : index
    %24 = vector.load %arg2[%c0_5, %c0_6] : memref<64x8xf32, #tpu.memory_space<vmem>>, vector<64x8xf32>
    %25 = arith.truncf %24 : vector<64x8xf32> to vector<64x8xbf16>
    %c0_7 = arith.constant 0 : index
    %c0_8 = arith.constant 0 : index
    %26 = vector.load %arg3[%c0_7, %c0_8] : memref<8x128xbf16, #tpu.memory_space<vmem>>, vector<8x128xbf16>
    %cst_9 = arith.constant dense<0.000000e+00> : vector<64x128xf32>
    %27 = tpu.matmul %25, %26, %cst_9 {dimension_numbers = #tpu.dot_dimension_numbers<[1], [0], [0], [1], [0, 0, 1, 1], [], []>} : vector<64x8xbf16>, vector<8x128xbf16>, vector<64x128xf32> -> vector<64x128xf32>
    %c0_10 = arith.constant 0 : index
    %c0_11 = arith.constant 0 : index
    %28 = vector.load %arg4[%c0_10, %c0_11] : memref<1x128xf32, #tpu.memory_space<vmem>>, vector<1x128xf32>
    %29 = vector.broadcast %28 : vector<1x128xf32> to vector<64x128xf32>
    %30 = arith.addf %27, %29 : vector<64x128xf32>
    %c0_12 = arith.constant 0 : index
    %c0_13 = arith.constant 0 : index
    %c0_14 = arith.constant 0 : index
    %31 = vector.load %arg8[%c0_12, %c0_13, %c0_14] : memref<3x1x512xf32, #tpu.memory_space<vmem>>, vector<1x1x512xf32>
    %32 = vector.shape_cast %31 : vector<1x1x512xf32> to vector<1x512xf32>
    %33 = vector.extract_strided_slice %30 {offsets = [0, 0], sizes = [64, 32], strides = [1, 1]} : vector<64x128xf32> to vector<64x32xf32>
    %34 = arith.truncf %33 : vector<64x32xf32> to vector<64x32xbf16>
    %c0_15 = arith.constant 0 : index
    %c0_16 = arith.constant 0 : index
    %35 = vector.load %arg5[%c0_15, %c0_16] : memref<32x512xbf16, #tpu.memory_space<vmem>>, vector<32x512xbf16>
    %cst_17 = arith.constant dense<0.000000e+00> : vector<64x512xf32>
    %36 = tpu.matmul %34, %35, %cst_17 {dimension_numbers = #tpu.dot_dimension_numbers<[1], [0], [0], [1], [0, 0, 1, 1], [], []>} : vector<64x32xbf16>, vector<32x512xbf16>, vector<64x512xf32> -> vector<64x512xf32>
    %37 = vector.broadcast %32 : vector<1x512xf32> to vector<64x512xf32>
    %38 = arith.addf %36, %37 : vector<64x512xf32>
    %39 = vector.extract_strided_slice %38 {offsets = [0, 0], sizes = [64, 128], strides = [1, 1]} : vector<64x512xf32> to vector<64x128xf32>
    %40 = vector.extract_strided_slice %38 {offsets = [0, 128], sizes = [64, 128], strides = [1, 1]} : vector<64x512xf32> to vector<64x128xf32>
    %41 = vector.extract_strided_slice %38 {offsets = [0, 256], sizes = [64, 128], strides = [1, 1]} : vector<64x512xf32> to vector<64x128xf32>
    %42 = vector.extract_strided_slice %38 {offsets = [0, 384], sizes = [64, 128], strides = [1, 1]} : vector<64x512xf32> to vector<64x128xf32>
    %43 = arith.truncf %39 : vector<64x128xf32> to vector<64x128xbf16>
    %44 = arith.truncf %40 : vector<64x128xf32> to vector<64x128xbf16>
    %cst_18 = arith.constant dense<0.000000e+00> : vector<64x64xf32>
    %45 = tpu.matmul %43, %44, %cst_18 {dimension_numbers = #tpu.dot_dimension_numbers<[1], [1], [0], [0], [0, 0, 1, 0], [], []>} : vector<64x128xbf16>, vector<64x128xbf16>, vector<64x64xf32> -> vector<64x64xf32>
    %cst_19 = arith.constant 1.250000e-01 : f32
    %46 = vector.broadcast %cst_19 : f32 to vector<64x64xf32>
    %47 = arith.mulf %45, %46 : vector<64x64xf32>
    %cst_20 = arith.constant -1.000000e+30 : f32
    %48 = vector.broadcast %cst_20 : f32 to vector<64x64xf32>
    %49 = arith.select %22, %47, %48 : vector<64x64xi1>, vector<64x64xf32>
    %cst_21 = arith.constant dense<0xFF800000> : vector<64xf32>
    %50 = vector.multi_reduction <maximumf>, %49, %cst_21 [1] : vector<64x64xf32> to vector<64xf32>
    %51 = vector.shape_cast %50 : vector<64xf32> to vector<64x1xf32>
    %52 = vector.broadcast %51 : vector<64x1xf32> to vector<64x64xf32>
    %53 = arith.subf %49, %52 : vector<64x64xf32>
    %54 = math.exp %53 : vector<64x64xf32>
    %55 = arith.mulf %20, %54 : vector<64x64xf32>
    %cst_22 = arith.constant dense<0.000000e+00> : vector<64xf32>
    %56 = vector.multi_reduction <add>, %55, %cst_22 [1] : vector<64x64xf32> to vector<64xf32>
    %57 = vector.shape_cast %56 : vector<64xf32> to vector<64x1xf32>
    %58 = arith.truncf %55 : vector<64x64xf32> to vector<64x64xbf16>
    %59 = arith.truncf %41 : vector<64x128xf32> to vector<64x128xbf16>
    %cst_23 = arith.constant dense<0.000000e+00> : vector<64x128xf32>
    %60 = tpu.matmul %58, %59, %cst_23 {dimension_numbers = #tpu.dot_dimension_numbers<[1], [0], [0], [1], [0, 0, 1, 1], [], []>} : vector<64x64xbf16>, vector<64x128xbf16>, vector<64x128xf32> -> vector<64x128xf32>
    %61 = tpu.reciprocal %57 {approx = true} : vector<64x1xf32> -> vector<64x1xf32>
    %62 = vector.broadcast %61 : vector<64x1xf32> to vector<64x128xf32>
    %63 = arith.mulf %60, %62 : vector<64x128xf32>
    %64 = arith.addf %63, %42 : vector<64x128xf32>
    %65 = arith.mulf %64, %64 : vector<64x128xf32>
    %66 = tpu.concatenate %64, %65 in 1 : vector<64x128xf32>, vector<64x128xf32> -> vector<64x256xf32>
    %cst_24 = arith.constant dense<0.000000e+00> : vector<1x256xf32>
    %67 = tpu.matmul %23, %66, %cst_24 {dimension_numbers = #tpu.dot_dimension_numbers<[1], [0], [0], [1], [0, 0, 1, 1], [], []>} : vector<1x64xf32>, vector<64x256xf32>, vector<1x256xf32> -> vector<1x256xf32>
    %68 = vector.extract_strided_slice %67 {offsets = [0, 0], sizes = [1, 128], strides = [1, 1]} : vector<1x256xf32> to vector<1x128xf32>
    %69 = vector.extract_strided_slice %67 {offsets = [0, 128], sizes = [1, 128], strides = [1, 1]} : vector<1x256xf32> to vector<1x128xf32>
    %70 = arith.mulf %68, %68 : vector<1x128xf32>
    %71 = arith.subf %69, %70 : vector<1x128xf32>
    %cst_25 = arith.constant 0.000000e+00 : f32
    %72 = vector.broadcast %cst_25 : f32 to vector<1x128xf32>
    %73 = arith.maximumf %71, %72 : vector<1x128xf32>
    %c0_26 = arith.constant 0 : index
    %c0_27 = arith.constant 0 : index
    %c0_28 = arith.constant 0 : index
    %74 = vector.load %arg9[%c0_26, %c0_27, %c0_28] : memref<2x1x128xf32, #tpu.memory_space<vmem>>, vector<1x1x128xf32>
    %75 = vector.shape_cast %74 : vector<1x1x128xf32> to vector<1x128xf32>
    %76 = vector.broadcast %68 : vector<1x128xf32> to vector<64x128xf32>
    %77 = arith.subf %64, %76 : vector<64x128xf32>
    %78 = vector.broadcast %75 : vector<1x128xf32> to vector<64x128xf32>
    %79 = arith.mulf %78, %77 : vector<64x128xf32>
    %cst_29 = arith.constant 9.99999974E-6 : f32
    %80 = vector.broadcast %cst_29 : f32 to vector<1x128xf32>
    %81 = arith.addf %73, %80 : vector<1x128xf32>
    %82 = math.rsqrt %81 : vector<1x128xf32>
    %83 = vector.broadcast %82 : vector<1x128xf32> to vector<64x128xf32>
    %84 = arith.mulf %79, %83 : vector<64x128xf32>
    %c0_30 = arith.constant 0 : index
    %c0_31 = arith.constant 0 : index
    %c0_32 = arith.constant 0 : index
    %85 = vector.load %arg10[%c0_30, %c0_31, %c0_32] : memref<2x1x128xf32, #tpu.memory_space<vmem>>, vector<1x1x128xf32>
    %86 = vector.shape_cast %85 : vector<1x1x128xf32> to vector<1x128xf32>
    %87 = vector.broadcast %86 : vector<1x128xf32> to vector<64x128xf32>
    %88 = arith.addf %84, %87 : vector<64x128xf32>
    %cst_33 = arith.constant 0.000000e+00 : f32
    %89 = vector.broadcast %cst_33 : f32 to vector<64x128xf32>
    %90 = arith.maximumf %88, %89 : vector<64x128xf32>
    %c1 = arith.constant 1 : index
    %c0_34 = arith.constant 0 : index
    %c0_35 = arith.constant 0 : index
    %91 = vector.load %arg8[%c1, %c0_34, %c0_35] : memref<3x1x512xf32, #tpu.memory_space<vmem>>, vector<1x1x512xf32>
    %92 = vector.shape_cast %91 : vector<1x1x512xf32> to vector<1x512xf32>
    %93 = vector.extract_strided_slice %90 {offsets = [0, 0], sizes = [64, 64], strides = [1, 1]} : vector<64x128xf32> to vector<64x64xf32>
    %94 = arith.truncf %93 : vector<64x64xf32> to vector<64x64xbf16>
    %c0_36 = arith.constant 0 : index
    %c0_37 = arith.constant 0 : index
    %95 = vector.load %arg6[%c0_36, %c0_37] : memref<64x512xbf16, #tpu.memory_space<vmem>>, vector<64x512xbf16>
    %cst_38 = arith.constant dense<0.000000e+00> : vector<64x512xf32>
    %96 = tpu.matmul %94, %95, %cst_38 {dimension_numbers = #tpu.dot_dimension_numbers<[1], [0], [0], [1], [0, 0, 1, 1], [], []>} : vector<64x64xbf16>, vector<64x512xbf16>, vector<64x512xf32> -> vector<64x512xf32>
    %97 = vector.broadcast %92 : vector<1x512xf32> to vector<64x512xf32>
    %98 = arith.addf %96, %97 : vector<64x512xf32>
    %99 = vector.extract_strided_slice %98 {offsets = [0, 0], sizes = [64, 128], strides = [1, 1]} : vector<64x512xf32> to vector<64x128xf32>
    %100 = vector.extract_strided_slice %98 {offsets = [0, 128], sizes = [64, 128], strides = [1, 1]} : vector<64x512xf32> to vector<64x128xf32>
    %101 = vector.extract_strided_slice %98 {offsets = [0, 256], sizes = [64, 128], strides = [1, 1]} : vector<64x512xf32> to vector<64x128xf32>
    %102 = vector.extract_strided_slice %98 {offsets = [0, 384], sizes = [64, 128], strides = [1, 1]} : vector<64x512xf32> to vector<64x128xf32>
    %103 = arith.truncf %99 : vector<64x128xf32> to vector<64x128xbf16>
    %104 = arith.truncf %100 : vector<64x128xf32> to vector<64x128xbf16>
    %cst_39 = arith.constant dense<0.000000e+00> : vector<64x64xf32>
    %105 = tpu.matmul %103, %104, %cst_39 {dimension_numbers = #tpu.dot_dimension_numbers<[1], [1], [0], [0], [0, 0, 1, 0], [], []>} : vector<64x128xbf16>, vector<64x128xbf16>, vector<64x64xf32> -> vector<64x64xf32>
    %cst_40 = arith.constant 0.176776692 : f32
    %106 = vector.broadcast %cst_40 : f32 to vector<64x64xf32>
    %107 = arith.mulf %105, %106 : vector<64x64xf32>
    %cst_41 = arith.constant -1.000000e+30 : f32
    %108 = vector.broadcast %cst_41 : f32 to vector<64x64xf32>
    %109 = arith.select %22, %107, %108 : vector<64x64xi1>, vector<64x64xf32>
    %cst_42 = arith.constant dense<0xFF800000> : vector<64xf32>
    %110 = vector.multi_reduction <maximumf>, %109, %cst_42 [1] : vector<64x64xf32> to vector<64xf32>
    %111 = vector.shape_cast %110 : vector<64xf32> to vector<64x1xf32>
    %112 = vector.broadcast %111 : vector<64x1xf32> to vector<64x64xf32>
    %113 = arith.subf %109, %112 : vector<64x64xf32>
    %114 = math.exp %113 : vector<64x64xf32>
    %115 = arith.mulf %20, %114 : vector<64x64xf32>
    %cst_43 = arith.constant dense<0.000000e+00> : vector<64xf32>
    %116 = vector.multi_reduction <add>, %115, %cst_43 [1] : vector<64x64xf32> to vector<64xf32>
    %117 = vector.shape_cast %116 : vector<64xf32> to vector<64x1xf32>
    %118 = arith.truncf %115 : vector<64x64xf32> to vector<64x64xbf16>
    %119 = arith.truncf %101 : vector<64x128xf32> to vector<64x128xbf16>
    %cst_44 = arith.constant dense<0.000000e+00> : vector<64x128xf32>
    %120 = tpu.matmul %118, %119, %cst_44 {dimension_numbers = #tpu.dot_dimension_numbers<[1], [0], [0], [1], [0, 0, 1, 1], [], []>} : vector<64x64xbf16>, vector<64x128xbf16>, vector<64x128xf32> -> vector<64x128xf32>
    %121 = tpu.reciprocal %117 {approx = true} : vector<64x1xf32> -> vector<64x1xf32>
    %122 = vector.broadcast %121 : vector<64x1xf32> to vector<64x128xf32>
    %123 = arith.mulf %120, %122 : vector<64x128xf32>
    %124 = arith.addf %123, %102 : vector<64x128xf32>
    %125 = arith.mulf %124, %124 : vector<64x128xf32>
    %126 = tpu.concatenate %124, %125 in 1 : vector<64x128xf32>, vector<64x128xf32> -> vector<64x256xf32>
    %cst_45 = arith.constant dense<0.000000e+00> : vector<1x256xf32>
    %127 = tpu.matmul %23, %126, %cst_45 {dimension_numbers = #tpu.dot_dimension_numbers<[1], [0], [0], [1], [0, 0, 1, 1], [], []>} : vector<1x64xf32>, vector<64x256xf32>, vector<1x256xf32> -> vector<1x256xf32>
    %128 = vector.extract_strided_slice %127 {offsets = [0, 0], sizes = [1, 128], strides = [1, 1]} : vector<1x256xf32> to vector<1x128xf32>
    %129 = vector.extract_strided_slice %127 {offsets = [0, 128], sizes = [1, 128], strides = [1, 1]} : vector<1x256xf32> to vector<1x128xf32>
    %130 = arith.mulf %128, %128 : vector<1x128xf32>
    %131 = arith.subf %129, %130 : vector<1x128xf32>
    %cst_46 = arith.constant 0.000000e+00 : f32
    %132 = vector.broadcast %cst_46 : f32 to vector<1x128xf32>
    %133 = arith.maximumf %131, %132 : vector<1x128xf32>
    %c1_47 = arith.constant 1 : index
    %c0_48 = arith.constant 0 : index
    %c0_49 = arith.constant 0 : index
    %134 = vector.load %arg9[%c1_47, %c0_48, %c0_49] : memref<2x1x128xf32, #tpu.memory_space<vmem>>, vector<1x1x128xf32>
    %135 = vector.shape_cast %134 : vector<1x1x128xf32> to vector<1x128xf32>
    %136 = vector.broadcast %128 : vector<1x128xf32> to vector<64x128xf32>
    %137 = arith.subf %124, %136 : vector<64x128xf32>
    %138 = vector.broadcast %135 : vector<1x128xf32> to vector<64x128xf32>
    %139 = arith.mulf %138, %137 : vector<64x128xf32>
    %cst_50 = arith.constant 9.99999974E-6 : f32
    %140 = vector.broadcast %cst_50 : f32 to vector<1x128xf32>
    %141 = arith.addf %133, %140 : vector<1x128xf32>
    %142 = math.rsqrt %141 : vector<1x128xf32>
    %143 = vector.broadcast %142 : vector<1x128xf32> to vector<64x128xf32>
    %144 = arith.mulf %139, %143 : vector<64x128xf32>
    %c1_51 = arith.constant 1 : index
    %c0_52 = arith.constant 0 : index
    %c0_53 = arith.constant 0 : index
    %145 = vector.load %arg10[%c1_51, %c0_52, %c0_53] : memref<2x1x128xf32, #tpu.memory_space<vmem>>, vector<1x1x128xf32>
    %146 = vector.shape_cast %145 : vector<1x1x128xf32> to vector<1x128xf32>
    %147 = vector.broadcast %146 : vector<1x128xf32> to vector<64x128xf32>
    %148 = arith.addf %144, %147 : vector<64x128xf32>
    %cst_54 = arith.constant 0.000000e+00 : f32
    %149 = vector.broadcast %cst_54 : f32 to vector<64x128xf32>
    %150 = arith.maximumf %148, %149 : vector<64x128xf32>
    %c2 = arith.constant 2 : index
    %c0_55 = arith.constant 0 : index
    %c0_56 = arith.constant 0 : index
    %151 = vector.load %arg8[%c2, %c0_55, %c0_56] : memref<3x1x512xf32, #tpu.memory_space<vmem>>, vector<1x1x512xf32>
    %152 = vector.shape_cast %151 : vector<1x1x512xf32> to vector<1x512xf32>
    %153 = vector.extract_strided_slice %150 {offsets = [0, 0], sizes = [64, 32], strides = [1, 1]} : vector<64x128xf32> to vector<64x32xf32>
    %154 = arith.truncf %153 : vector<64x32xf32> to vector<64x32xbf16>
    %c0_57 = arith.constant 0 : index
    %c0_58 = arith.constant 0 : index
    %155 = vector.load %arg7[%c0_57, %c0_58] : memref<32x512xbf16, #tpu.memory_space<vmem>>, vector<32x512xbf16>
    %cst_59 = arith.constant dense<0.000000e+00> : vector<64x512xf32>
    %156 = tpu.matmul %154, %155, %cst_59 {dimension_numbers = #tpu.dot_dimension_numbers<[1], [0], [0], [1], [0, 0, 1, 1], [], []>} : vector<64x32xbf16>, vector<32x512xbf16>, vector<64x512xf32> -> vector<64x512xf32>
    %157 = vector.broadcast %152 : vector<1x512xf32> to vector<64x512xf32>
    %158 = arith.addf %156, %157 : vector<64x512xf32>
    %159 = vector.extract_strided_slice %158 {offsets = [0, 0], sizes = [64, 128], strides = [1, 1]} : vector<64x512xf32> to vector<64x128xf32>
    %160 = vector.extract_strided_slice %158 {offsets = [0, 128], sizes = [64, 128], strides = [1, 1]} : vector<64x512xf32> to vector<64x128xf32>
    %161 = vector.extract_strided_slice %158 {offsets = [0, 256], sizes = [64, 128], strides = [1, 1]} : vector<64x512xf32> to vector<64x128xf32>
    %162 = vector.extract_strided_slice %158 {offsets = [0, 384], sizes = [64, 128], strides = [1, 1]} : vector<64x512xf32> to vector<64x128xf32>
    %163 = arith.truncf %159 : vector<64x128xf32> to vector<64x128xbf16>
    %164 = arith.truncf %160 : vector<64x128xf32> to vector<64x128xbf16>
    %cst_60 = arith.constant dense<0.000000e+00> : vector<64x64xf32>
    %165 = tpu.matmul %163, %164, %cst_60 {dimension_numbers = #tpu.dot_dimension_numbers<[1], [1], [0], [0], [0, 0, 1, 0], [], []>} : vector<64x128xbf16>, vector<64x128xbf16>, vector<64x64xf32> -> vector<64x64xf32>
    %cst_61 = arith.constant 0.176776692 : f32
    %166 = vector.broadcast %cst_61 : f32 to vector<64x64xf32>
    %167 = arith.mulf %165, %166 : vector<64x64xf32>
    %cst_62 = arith.constant -1.000000e+30 : f32
    %168 = vector.broadcast %cst_62 : f32 to vector<64x64xf32>
    %169 = arith.select %22, %167, %168 : vector<64x64xi1>, vector<64x64xf32>
    %cst_63 = arith.constant dense<0xFF800000> : vector<64xf32>
    %170 = vector.multi_reduction <maximumf>, %169, %cst_63 [1] : vector<64x64xf32> to vector<64xf32>
    %171 = vector.shape_cast %170 : vector<64xf32> to vector<64x1xf32>
    %172 = vector.broadcast %171 : vector<64x1xf32> to vector<64x64xf32>
    %173 = arith.subf %169, %172 : vector<64x64xf32>
    %174 = math.exp %173 : vector<64x64xf32>
    %175 = arith.mulf %20, %174 : vector<64x64xf32>
    %cst_64 = arith.constant dense<0.000000e+00> : vector<64xf32>
    %176 = vector.multi_reduction <add>, %175, %cst_64 [1] : vector<64x64xf32> to vector<64xf32>
    %177 = vector.shape_cast %176 : vector<64xf32> to vector<64x1xf32>
    %178 = arith.truncf %175 : vector<64x64xf32> to vector<64x64xbf16>
    %179 = arith.truncf %161 : vector<64x128xf32> to vector<64x128xbf16>
    %cst_65 = arith.constant dense<0.000000e+00> : vector<64x128xf32>
    %180 = tpu.matmul %178, %179, %cst_65 {dimension_numbers = #tpu.dot_dimension_numbers<[1], [0], [0], [1], [0, 0, 1, 1], [], []>} : vector<64x64xbf16>, vector<64x128xbf16>, vector<64x128xf32> -> vector<64x128xf32>
    %181 = tpu.reciprocal %177 {approx = true} : vector<64x1xf32> -> vector<64x1xf32>
    %182 = vector.broadcast %181 : vector<64x1xf32> to vector<64x128xf32>
    %183 = arith.mulf %180, %182 : vector<64x128xf32>
    %184 = arith.addf %183, %162 : vector<64x128xf32>
    %c0_66 = arith.constant 0 : index
    %c0_67 = arith.constant 0 : index
    %185 = vector.load %arg11[%c0_66, %c0_67] : memref<64x128xf32, #tpu.memory_space<vmem>>, vector<64x128xf32>
    tpu.vector_store %arg11[%c0_66, %c0_67], %184 {strides = array<i32>} : memref<64x128xf32, #tpu.memory_space<vmem>>, vector<64x128xf32>,
    return
  }
}

</mosaic_0001>

<llo_original>
// kernel: forward.1
$region0: #{forward.1}
  #allocation0 [shape = 'u32[]', space=smem, size = 0x4, offset = 0x4, fixed_abs, tag = 'smem constant byte address 0x4 - core index']
  #allocation1 [shape = 'u32[72,128]{1,0:T(1,128)}', space=vmem, size = 0x9000, scoped, tag = 'internal scratch']
  %s0 = inlined_call_operand.vmem [shape: s32[1,128], index: 0, kind: input, shape index: {}]
  %s1 = inlined_call_operand.vmem [shape: s32[128,1], index: 1, kind: input, shape index: {}]
  %s2 = inlined_call_operand.vmem [shape: f32[64,8], index: 2, kind: input, shape index: {}]
  %s3 = inlined_call_operand.hbm [shape: bf16[8,128], index: 3, kind: input, shape index: {}]
  %s4 = inlined_call_operand.vmem [shape: f32[1,128], index: 4, kind: input, shape index: {}]
  %s5 = inlined_call_operand.vmem [shape: bf16[32,512], index: 5, kind: input, shape index: {}]
  %s6 = inlined_call_operand.vmem [shape: bf16[64,512], index: 6, kind: input, shape index: {}]
  %s7 = inlined_call_operand.hbm [shape: bf16[32,512], index: 7, kind: input, shape index: {}]
  %s8 = inlined_call_operand.vmem [shape: f32[3,1,512], index: 8, kind: input, shape index: {}]
  %s9 = inlined_call_operand.hbm [shape: f32[2,1,128], index: 9, kind: input, shape index: {}]
  %s10 = inlined_call_operand.hbm [shape: f32[2,1,128], index: 10, kind: input, shape index: {}]
  %s11 = inlined_call_operand.vmem [shape: f32[64,128], index: 11, kind: output, shape index: {}]
  %s12 = sld [smem:[#allocation0]]
  $region70: #{forward.1} parent=0
    _
  %s14 = ssub.s32 1, %s12
  %s15 = scalar_select 0, %s14, %s12
  $region1: #{forward.1} parent=0
    #allocation2 [shape = 'u8[2048]{0}', space=vmem, size = 0x800, scoped, tag = 'input window, operand 3, single buffered']
    #allocation3 [shape = 's32[1]{0}', space=sflag, size = 0x4, scoped, tag = 'scoped memory for forward.1']
    #allocation4 [shape = 'u8[32768]{0}', space=vmem, size = 0x8000, scoped, tag = 'input window, operand 7, single buffered']
    #allocation5 [shape = 's32[1]{0}', space=sflag, size = 0x4, scoped, tag = 'scoped memory for forward.1']
    #allocation6 [shape = 'u8[1024]{0}', space=vmem, size = 0x400, scoped, tag = 'input window, operand 9, single buffered']
    #allocation7 [shape = 'u8[1024]{0}', space=vmem, size = 0x400, scoped, tag = 'input window, operand 10, single buffered']
    #allocation8 [shape = 's32[1]{0}', space=sflag, size = 0x4, scoped, tag = 'scoped memory for forward.1']
    %16 = vsyncpa [#allocation3], 0
    %17 = vsyncpa [#allocation5], 0
    %18 = vsyncpa [#allocation8], 0
    // Predicated region
    $region2: #{forward.1} parent=1 // pred_check
      _
    $region3: #{forward.1} parent=1 // pred_check_branch
      %20 = sbr.rel (0) target = $region5
    $region4: #{forward.1} parent=1 // pred_region
      _
    $region5: #{forward.1} parent=1 // pred_fallthru
      _
    // Predicated region
    $region6: #{forward.1} parent=1 // pred_check
      _
    $region7: #{forward.1} parent=1 // pred_check_branch
      %22 = sbr.rel (0) target = $region9
    $region8: #{forward.1} parent=1 // pred_region
      _
    $region9: #{forward.1} parent=1 // pred_fallthru
      _
    // Predicated region
    $region10: #{forward.1} parent=1 // pred_check
      _
    $region11: #{forward.1} parent=1 // pred_check_branch
      %24 = sbr.rel (0) target = $region13
    $region12: #{forward.1} parent=1 // pred_region
      _
    $region13: #{forward.1} parent=1 // pred_fallthru
      _
    // Predicated region
    $region14: #{forward.1} parent=1 // pred_check
      _
    $region15: #{forward.1} parent=1 // pred_check_branch
      %26 = sbr.rel (0) target = $region17
    $region16: #{forward.1} parent=1 // pred_region
      %28 = vsyncadd [#allocation3], 0
      %s30 = sshll.u32 %s3, 4
      %s31 = int_to_ptr.hbm [resolvable:$true] %s30
      %s32 = sshll.u32 [#allocation2], 4
      %s33 = int_to_ptr.vmem [resolvable:$true] %s32
      %35 = dma.hbm_to_vmem [thread:$0]  %s31, 64, %s33, [#allocation3]
    $region17: #{forward.1} parent=1 // pred_fallthru
      _
    // Predicated region
    $region18: #{forward.1} parent=1 // pred_check
      _
    $region19: #{forward.1} parent=1 // pred_check_branch
      %37 = sbr.rel (0) target = $region21
    $region20: #{forward.1} parent=1 // pred_region
      _
    $region21: #{forward.1} parent=1 // pred_fallthru
      _
    // Predicated region
    $region22: #{forward.1} parent=1 // pred_check
      _
    $region23: #{forward.1} parent=1 // pred_check_branch
      %39 = sbr.rel (0) target = $region25
    $region24: #{forward.1} parent=1 // pred_region
      _
    $region25: #{forward.1} parent=1 // pred_fallthru
      _
    // Predicated region
    $region26: #{forward.1} parent=1 // pred_check
      _
    $region27: #{forward.1} parent=1 // pred_check_branch
      %41 = sbr.rel (0) target = $region29
    $region28: #{forward.1} parent=1 // pred_region
      _
    $region29: #{forward.1} parent=1 // pred_fallthru
      _
    // Predicated region
    $region30: #{forward.1} parent=1 // pred_check
      _
    $region31: #{forward.1} parent=1 // pred_check_branch
      %43 = sbr.rel (0) target = $region33
    $region32: #{forward.1} parent=1 // pred_region
      %45 = vsyncadd [#allocation5], 0
      %s46 = sshll.u32 %s7, 4
      %s47 = int_to_ptr.hbm [resolvable:$true] %s46
      %s48 = sshll.u32 [#allocation4], 4
      %s49 = int_to_ptr.vmem [resolvable:$true] %s48
      %54 = dma.hbm_to_vmem [thread:$0]  %s47, 1024, %s49, [#allocation5], 256, 256, 16
    $region33: #{forward.1} parent=1 // pred_fallthru
      _
    // Predicated region
    $region34: #{forward.1} parent=1 // pred_check
      _
    $region35: #{forward.1} parent=1 // pred_check_branch
      %56 = sbr.rel (0) target = $region37
    $region36: #{forward.1} parent=1 // pred_region
      _
    $region37: #{forward.1} parent=1 // pred_fallthru
      _
    // Predicated region
    $region38: #{forward.1} parent=1 // pred_check
      _
    $region39: #{forward.1} parent=1 // pred_check_branch
      %58 = sbr.rel (0) target = $region41
    $region40: #{forward.1} parent=1 // pred_region
      %60 = vsyncadd [#allocation5], 0
      %s61 = sshll.u32 %s9, 4
      %s62 = int_to_ptr.hbm [resolvable:$true] %s61
      %s63 = sshll.u32 [#allocation6], 4
      %s64 = int_to_ptr.vmem [resolvable:$true] %s63
      %69 = dma.hbm_to_vmem [thread:$0]  %s62, 32, %s64, [#allocation5], 16, 16, 1
    $region41: #{forward.1} parent=1 // pred_fallthru
      _
    // Predicated region
    $region42: #{forward.1} parent=1 // pred_check
      _
    $region43: #{forward.1} parent=1 // pred_check_branch
      %71 = sbr.rel (0) target = $region45
    $region44: #{forward.1} parent=1 // pred_region
      %73 = vsyncadd [#allocation8], 0
      %s74 = sshll.u32 %s10, 4
      %s75 = int_to_ptr.hbm [resolvable:$true] %s74
      %s76 = sshll.u32 [#allocation7], 4
      %s77 = int_to_ptr.vmem [resolvable:$true] %s76
      %82 = dma.hbm_to_vmem [thread:$0]  %s75, 32, %s77, [#allocation8], 16, 16, 1
    $region45: #{forward.1} parent=1 // pred_fallthru
      _
    // Predicated region
    $region46: #{forward.1} parent=1 // pred_check
      _
    $region47: #{forward.1} parent=1 // pred_check_branch
      %84 = sbr.rel (0) target = $region49
    $region48: #{forward.1} parent=1 // pred_region
      %86 = dma.done [#allocation3], 64
    $region49: #{forward.1} parent=1 // pred_fallthru
      _
    // Predicated region
    $region50: #{forward.1} parent=1 // pred_check
      _
    $region51: #{forward.1} parent=1 // pred_check_branch
      %88 = sbr.rel (0) target = $region53
    $region52: #{forward.1} parent=1 // pred_region
      %90 = dma.done [#allocation5], 1024
    $region53: #{forward.1} parent=1 // pred_fallthru
      _
    // Predicated region
    $region54: #{forward.1} parent=1 // pred_check
      _
    $region55: #{forward.1} parent=1 // pred_check_branch
      %92 = sbr.rel (0) target = $region57
    $region56: #{forward.1} parent=1 // pred_region
      %94 = dma.done [#allocation5], 32
    $region57: #{forward.1} parent=1 // pred_fallthru
      _
    // Predicated region
    $region58: #{forward.1} parent=1 // pred_check
      _
    $region59: #{forward.1} parent=1 // pred_check_branch
      %96 = sbr.rel (0) target = $region61
    $region60: #{forward.1} parent=1 // pred_region
      %98 = dma.done [#allocation8], 32
    $region61: #{forward.1} parent=1 // pred_fallthru
      _
    %v100 = vld [vmem:[%s0] sm:$0x1]
    %v101 = vld [vmem:[%s1] sm:$0xff]
    %v102 = vld [vmem:[%s1 + $0x8] sm:$0xff]
    %v103 = vld [vmem:[%s1 + $0x10] sm:$0xff]
    %v104 = vld [vmem:[%s1 + $0x18] sm:$0xff]
    %v105 = vld [vmem:[%s1 + $0x20] sm:$0xff]
    %v106 = vld [vmem:[%s1 + $0x28] sm:$0xff]
    %v107 = vld [vmem:[%s1 + $0x30] sm:$0xff]
    %v108 = vld [vmem:[%s1 + $0x38] sm:$0xff]
    %v109 = vld [vmem:[%s1 + $0x40] sm:$0xff]
    %v110 = vld [vmem:[%s1 + $0x48] sm:$0xff]
    %v111 = vld [vmem:[%s1 + $0x50] sm:$0xff]
    %v112 = vld [vmem:[%s1 + $0x58] sm:$0xff]
    %v113 = vld [vmem:[%s1 + $0x60] sm:$0xff]
    %v114 = vld [vmem:[%s1 + $0x68] sm:$0xff]
    %v115 = vld [vmem:[%s1 + $0x70] sm:$0xff]
    %v116 = vld [vmem:[%s1 + $0x78] sm:$0xff]
    %v117 = vlaneseq
    %v118 = vshrl.u32 %v117, 7
    %v119 = vadd.s32 %v118, 8
    %v120 = vadd.s32 %v118, 16
    %v121 = vadd.s32 %v118, 24
    %v122 = vadd.s32 %v118, 32
    %v123 = vadd.s32 %v118, 40
    %v124 = vadd.s32 %v118, 48
    %v125 = vadd.s32 %v118, 56
    %v126 = vperm.slane %v100, 0
    %vm127 = vcmp.eq.s32.totalorder %v118, %v126
    %vm128 = vcmp.eq.s32.totalorder %v119, %v126
    %vm129 = vcmp.eq.s32.totalorder %v120, %v126
    %vm130 = vcmp.eq.s32.totalorder %v121, %v126
    %vm131 = vcmp.eq.s32.totalorder %v122, %v126
    %vm132 = vcmp.eq.s32.totalorder %v123, %v126
    %vm133 = vcmp.eq.s32.totalorder %v124, %v126
    %vm134 = vcmp.eq.s32.totalorder %v125, %v126
    %v135 = vsel %vm127, 1, 0
    %v136 = vsel %vm128, 1, 0
    %v137 = vsel %vm129, 1, 0
    %v138 = vsel %vm130, 1, 0
    %v139 = vsel %vm131, 1, 0
    %v140 = vsel %vm132, 1, 0
    %v141 = vsel %vm133, 1, 0
    %v142 = vsel %vm134, 1, 0
    %v143 = vcvt.s32.f32 %v135
    %v144 = vcvt.s32.f32 %v136
    %v145 = vcvt.s32.f32 %v137
    %v146 = vcvt.s32.f32 %v138
    %v147 = vcvt.s32.f32 %v139
    %v148 = vcvt.s32.f32 %v140
    %v149 = vcvt.s32.f32 %v141
    %v150 = vcvt.s32.f32 %v142
    %v151 = vpack.c.bf16 %v144, %v143
    %v152 = vpack.c.bf16 %v146, %v145
    %v153 = vpack.c.bf16 %v148, %v147
    %v154 = vpack.c.bf16 %v150, %v149
    %v155 = vlaneseq
    %v156 = vand.u32 %v155, 127
    %157 = vset.pattern.permute.xlu0 0
    %158 = vperm.xlu0 %157, %v101
    %v159 = vpop.permute.xlu0 %158
    %160 = vset.pattern.permute.xlu0 0
    %161 = vperm.xlu0 %160, %v102
    %v162 = vpop.permute.xlu0 %161
    %163 = vset.pattern.permute.xlu0 0
    %164 = vperm.xlu0 %163, %v103
    %v165 = vpop.permute.xlu0 %164
    %166 = vset.pattern.permute.xlu0 0
    %167 = vperm.xlu0 %166, %v104
    %v168 = vpop.permute.xlu0 %167
    %169 = vset.pattern.permute.xlu0 0
    %170 = vperm.xlu0 %169, %v105
    %v171 = vpop.permute.xlu0 %170
    %172 = vset.pattern.permute.xlu0 0
    %173 = vperm.xlu0 %172, %v106
    %v174 = vpop.permute.xlu0 %173
    %175 = vset.pattern.permute.xlu0 0
    %176 = vperm.xlu0 %175, %v107
    %v177 = vpop.permute.xlu0 %176
    %178 = vset.pattern.permute.xlu0 0
    %179 = vperm.xlu0 %178, %v108
    %v180 = vpop.permute.xlu0 %179
    %181 = vset.pattern.permute.xlu0 0
    %182 = vperm.xlu0 %181, %v109
    %v183 = vpop.permute.xlu0 %182
    %184 = vset.pattern.permute.xlu0 0
    %185 = vperm.xlu0 %184, %v110
    %v186 = vpop.permute.xlu0 %185
    %187 = vset.pattern.permute.xlu0 0
    %188 = vperm.xlu0 %187, %v111
    %v189 = vpop.permute.xlu0 %188
    %190 = vset.pattern.permute.xlu0 0
    %191 = vperm.xlu0 %190, %v112
    %v192 = vpop.permute.xlu0 %191
    %193 = vset.pattern.permute.xlu0 0
    %194 = vperm.xlu0 %193, %v113
    %v195 = vpop.permute.xlu0 %194
    %196 = vset.pattern.permute.xlu0 0
    %197 = vperm.xlu0 %196, %v114
    %v198 = vpop.permute.xlu0 %197
    %199 = vset.pattern.permute.xlu0 0
    %200 = vperm.xlu0 %199, %v115
    %v201 = vpop.permute.xlu0 %200
    %202 = vset.pattern.permute.xlu0 0
    %203 = vperm.xlu0 %202, %v116
    %v204 = vpop.permute.xlu0 %203
    %vm205 = vcmp.eq.s32.totalorder %v156, %v159
    %vm206 = vcmp.eq.s32.totalorder %v156, %v162
    %vm207 = vcmp.eq.s32.totalorder %v156, %v165
    %vm208 = vcmp.eq.s32.totalorder %v156, %v168
    %vm209 = vcmp.eq.s32.totalorder %v156, %v171
    %vm210 = vcmp.eq.s32.totalorder %v156, %v174
    %vm211 = vcmp.eq.s32.totalorder %v156, %v177
    %vm212 = vcmp.eq.s32.totalorder %v156, %v180
    %vm213 = vcmp.eq.s32.totalorder %v156, %v183
    %vm214 = vcmp.eq.s32.totalorder %v156, %v186
    %vm215 = vcmp.eq.s32.totalorder %v156, %v189
    %vm216 = vcmp.eq.s32.totalorder %v156, %v192
    %vm217 = vcmp.eq.s32.totalorder %v156, %v195
    %vm218 = vcmp.eq.s32.totalorder %v156, %v198
    %vm219 = vcmp.eq.s32.totalorder %v156, %v201
    %vm220 = vcmp.eq.s32.totalorder %v156, %v204
    %v221 = vsel %vm205, 1, 0
    %v222 = vsel %vm206, 1, 0
    %v223 = vsel %vm207, 1, 0
    %v224 = vsel %vm208, 1, 0
    %v225 = vsel %vm209, 1, 0
    %v226 = vsel %vm210, 1, 0
    %v227 = vsel %vm211, 1, 0
    %v228 = vsel %vm212, 1, 0
    %v229 = vsel %vm213, 1, 0
    %v230 = vsel %vm214, 1, 0
    %v231 = vsel %vm215, 1, 0
    %v232 = vsel %vm216, 1, 0
    %v233 = vsel %vm217, 1, 0
    %v234 = vsel %vm218, 1, 0
    %v235 = vsel %vm219, 1, 0
    %v236 = vsel %vm220, 1, 0
    %v237 = vcvt.s32.f32 %v221
    %v238 = vcvt.s32.f32 %v222
    %v239 = vcvt.s32.f32 %v223
    %v240 = vcvt.s32.f32 %v224
    %v241 = vcvt.s32.f32 %v225
    %v242 = vcvt.s32.f32 %v226
    %v243 = vcvt.s32.f32 %v227
    %v244 = vcvt.s32.f32 %v228
    %v245 = vcvt.s32.f32 %v229
    %v246 = vcvt.s32.f32 %v230
    %v247 = vcvt.s32.f32 %v231
    %v248 = vcvt.s32.f32 %v232
    %v249 = vcvt.s32.f32 %v233
    %v250 = vcvt.s32.f32 %v234
    %v251 = vcvt.s32.f32 %v235
    %v252 = vcvt.s32.f32 %v236
    %v253 = vpack.c.bf16 %v238, %v237
    %v254 = vpack.c.bf16 %v240, %v239
    %v255 = vpack.c.bf16 %v242, %v241
    %v256 = vpack.c.bf16 %v244, %v243
    %v257 = vpack.c.bf16 %v246, %v245
    %v258 = vpack.c.bf16 %v248, %v247
    %v259 = vpack.c.bf16 %v250, %v249
    %v260 = vpack.c.bf16 %v252, %v251
    %vm261 = vcmp.eq.s32.totalorder %v118, %v156
    %vm262 = vcmp.eq.s32.totalorder %v119, %v156
    %vm263 = vcmp.eq.s32.totalorder %v120, %v156
    %vm264 = vcmp.eq.s32.totalorder %v121, %v156
    %vm265 = vcmp.eq.s32.totalorder %v122, %v156
    %vm266 = vcmp.eq.s32.totalorder %v123, %v156
    %vm267 = vcmp.eq.s32.totalorder %v124, %v156
    %vm268 = vcmp.eq.s32.totalorder %v125, %v156
    %v269 = vsel %vm261, 1, 0
    %v270 = vsel %vm262, 1, 0
    %v271 = vsel %vm263, 1, 0
    %v272 = vsel %vm264, 1, 0
    %v273 = vsel %vm265, 1, 0
    %v274 = vsel %vm266, 1, 0
    %v275 = vsel %vm267, 1, 0
    %v276 = vsel %vm268, 1, 0
    %v277 = vcvt.s32.f32 %v269
    %v278 = vcvt.s32.f32 %v270
    %v279 = vcvt.s32.f32 %v271
    %v280 = vcvt.s32.f32 %v272
    %v281 = vcvt.s32.f32 %v273
    %v282 = vcvt.s32.f32 %v274
    %v283 = vcvt.s32.f32 %v275
    %v284 = vcvt.s32.f32 %v276
    %285 = vmatpush.bf16.msra.mxu0 %v260
    %286 = vmatpush.bf16.msra.mxu0 %v259
    %287 = vmatpush.bf16.msra.mxu0 %v258
    %288 = vmatpush.bf16.msra.mxu0 %v257
    %289 = vmatpush.bf16.msra.mxu0 %v256
    %290 = vmatpush.bf16.msra.mxu0 %v255
    %291 = vmatpush.bf16.msra.mxu0 %v254
    %292 = vmatpush.bf16.msra.mxu0 %v253
    %293 = vmatmul.bf16.gmra.mxu0 %v151
    %v294 = vpop.f32.mrf.mxu0
    %v295 = vadd.f32 %v277, %v294
    %v296 = vpop.f32.mrf.mxu0
    %v297 = vadd.f32 %v278, %v296
    %298 = vmatmul.bf16.gmra.mxu0 %v152
    %v299 = vpop.f32.mrf.mxu0
    %v300 = vadd.f32 %v279, %v299
    %v301 = vpop.f32.mrf.mxu0
    %v302 = vadd.f32 %v280, %v301
    %303 = vmatmul.bf16.gmra.mxu0 %v153
    %v304 = vpop.f32.mrf.mxu0
    %v305 = vadd.f32 %v281, %v304
    %v306 = vpop.f32.mrf.mxu0
    %v307 = vadd.f32 %v282, %v306
    %308 = vmatmul.bf16.gmra.mxu0 %v154
    %v309 = vpop.f32.mrf.mxu0
    %v310 = vadd.f32 %v283, %v309
    %v311 = vpop.f32.mrf.mxu0
    %v312 = vadd.f32 %v284, %v311
    %313 = vdwg.mxu0
    %vm314 = vcmp.gt.f32.partialorder %v295, 0.0
    %vm315 = vcmp.gt.f32.partialorder %v297, 0.0
    %vm316 = vcmp.gt.f32.partialorder %v300, 0.0
    %vm317 = vcmp.gt.f32.partialorder %v302, 0.0
    %vm318 = vcmp.gt.f32.partialorder %v305, 0.0
    %vm319 = vcmp.gt.f32.partialorder %v307, 0.0
    %vm320 = vcmp.gt.f32.partialorder %v310, 0.0
    %vm321 = vcmp.gt.f32.partialorder %v312, 0.0
    %v322 = vld [vmem:[%s2] sm:$0xff]
    %v323 = vld [vmem:[%s2 + $0x8] sm:$0xff]
    %v324 = vld [vmem:[%s2 + $0x10] sm:$0xff]
    %v325 = vld [vmem:[%s2 + $0x18] sm:$0xff]
    %v326 = vld [vmem:[%s2 + $0x20] sm:$0xff]
    %v327 = vld [vmem:[%s2 + $0x28] sm:$0xff]
    %v328 = vld [vmem:[%s2 + $0x30] sm:$0xff]
    %v329 = vld [vmem:[%s2 + $0x38] sm:$0xff]
    %v330 = vpack.c.bf16 %v323, %v322
    %v331 = vpack.c.bf16 %v325, %v324
    %v332 = vpack.c.bf16 %v327, %v326
    %v333 = vpack.c.bf16 %v329, %v328
    %v334 = vld [vmem:[#allocation2] sm:$0xf]
    %v335 = vld [vmem:[%s4] sm:$0x1]
    %v337 = vperm.slane %v335, 0
    %vm339 = vcmask 64512
    %v341 = vsel %vm339, %v330, 0
    %v344 = vsel %vm339, %v331, 0
    %v347 = vsel %vm339, %v332, 0
    %v350 = vsel %vm339, %v333, 0
    %vm352 = vcmask 1043456
    %v354 = vsel %vm352, %v334, 0
    %356 = vmatpush.bf16.msra.mxu0 0
    %357 = vmatpush.bf16.msra.mxu0 0
    %358 = vmatpush.bf16.msra.mxu0 0
    %359 = vmatpush.bf16.msra.mxu0 0
    %360 = vmatpush.bf16.msra.mxu0 0
    %361 = vmatpush.bf16.msra.mxu0 0
    %362 = vmatpush.bf16.msra.mxu0 0
    %363 = vmatpush.bf16.msra.mxu0 %v354
    %364 = vmatmul.bf16.gmra.mxu0 %v341
    %v365 = vpop.f32.mrf.mxu0
    %v366 = vadd.f32 %v337, %v365
    %v367 = vpop.f32.mrf.mxu0
    %v368 = vadd.f32 %v337, %v367
    %369 = vmatmul.bf16.gmra.mxu0 %v344
    %v370 = vpop.f32.mrf.mxu0
    %v371 = vadd.f32 %v337, %v370
    %v372 = vpop.f32.mrf.mxu0
    %v373 = vadd.f32 %v337, %v372
    %374 = vmatmul.bf16.gmra.mxu0 %v347
    %v375 = vpop.f32.mrf.mxu0
    %v376 = vadd.f32 %v337, %v375
    %v377 = vpop.f32.mrf.mxu0
    %v378 = vadd.f32 %v337, %v377
    %379 = vmatmul.bf16.gmra.mxu0 %v350
    %v380 = vpop.f32.mrf.mxu0
    %v381 = vadd.f32 %v337, %v380
    %v382 = vpop.f32.mrf.mxu0
    %v383 = vadd.f32 %v337, %v382
    %384 = vdwg.mxu0
    %v385 = vld [vmem:[%s8] sm:$0xf]
    %v386 = vpack.c.bf16 %v368, %v366
    %v387 = vpack.c.bf16 %v373, %v371
    %v388 = vpack.c.bf16 %v378, %v376
    %v389 = vpack.c.bf16 %v383, %v381
    %v390 = vld [vmem:[%s5] sm:$0xff]
    %v391 = vld [vmem:[%s5 + $0x8] sm:$0xff]
    %v392 = vld [vmem:[%s5 + $0x10] sm:$0xff]
    %v393 = vld [vmem:[%s5 + $0x18] sm:$0xff]
    %v394 = vld [vmem:[%s5 + $0x20] sm:$0xff]
    %v395 = vld [vmem:[%s5 + $0x28] sm:$0xff]
    %v396 = vld [vmem:[%s5 + $0x30] sm:$0xff]
    %v397 = vld [vmem:[%s5 + $0x38] sm:$0xff]
    %v399 = vperm.slane %v385, 0
    %v400 = vperm.slane %v385, 1
    %v401 = vperm.slane %v385, 2
    %v402 = vperm.slane %v385, 3
    %v415 = vunpack.c.l.b16 %v390
    %v416 = vunpack.c.h.b16 %v390
    %v417 = vunpack.c.l.b16 %v391
    %v418 = vunpack.c.h.b16 %v391
    %v419 = vunpack.c.l.b16 %v392
    %v420 = vunpack.c.h.b16 %v392
    %v421 = vunpack.c.l.b16 %v393
    %v422 = vunpack.c.h.b16 %v393
    %v423 = vunpack.c.l.b16 %v394
    %v424 = vunpack.c.h.b16 %v394
    %v425 = vunpack.c.l.b16 %v395
    %v426 = vunpack.c.h.b16 %v395
    %v427 = vunpack.c.l.b16 %v396
    %v428 = vunpack.c.h.b16 %v396
    %v429 = vunpack.c.l.b16 %v397
    %v430 = vunpack.c.h.b16 %v397
    %v431 = vpack.c.b16 %v419, %v415
    %v432 = vpack.c.b16 %v420, %v416
    %v433 = vpack.c.b16 %v421, %v417
    %v434 = vpack.c.b16 %v422, %v418
    %v435 = vpack.c.b16 %v427, %v423
    %v436 = vpack.c.b16 %v428, %v424
    %v437 = vpack.c.b16 %v429, %v425
    %v438 = vpack.c.b16 %v430, %v426
    %vm447 = vcmask 261120
    %v449 = vsel %vm447, %v386, 0
    %v452 = vsel %vm447, %v387, 0
    %v455 = vsel %vm447, %v388, 0
    %v458 = vsel %vm447, %v389, 0
    %460 = vmatpush.bf16.msra.mxu0 0
    %461 = vmatpush.bf16.msra.mxu0 0
    %462 = vmatpush.bf16.msra.mxu0 0
    %463 = vmatpush.bf16.msra.mxu0 0
    %464 = vmatpush.bf16.msra.mxu0 0
    %465 = vmatpush.bf16.msra.mxu0 0
    %466 = vmatpush.bf16.msra.mxu0 %v435
    %467 = vmatpush.bf16.msra.mxu0 %v431
    %468 = vmatmul.bf16.gmra.mxu0 %v449
    %v469 = vpop.f32.mrf.mxu0
    %v470 = vadd.f32 %v399, %v469
    %v471 = vpop.f32.mrf.mxu0
    %v472 = vadd.f32 %v399, %v471
    %473 = vmatmul.bf16.gmra.mxu0 %v452
    %v474 = vpop.f32.mrf.mxu0
    %v475 = vadd.f32 %v399, %v474
    %v476 = vpop.f32.mrf.mxu0
    %v477 = vadd.f32 %v399, %v476
    %478 = vmatmul.bf16.gmra.mxu0 %v455
    %v479 = vpop.f32.mrf.mxu0
    %v480 = vadd.f32 %v399, %v479
    %v481 = vpop.f32.mrf.mxu0
    %v482 = vadd.f32 %v399, %v481
    %483 = vmatmul.bf16.gmra.mxu0 %v458
    %v484 = vpop.f32.mrf.mxu0
    %v485 = vadd.f32 %v399, %v484
    %v486 = vpop.f32.mrf.mxu0
    %v487 = vadd.f32 %v399, %v486
    %488 = vdwg.mxu0
    %489 = vmatpush.bf16.msra.mxu0 0
    %490 = vmatpush.bf16.msra.mxu0 0
    %491 = vmatpush.bf16.msra.mxu0 0
    %492 = vmatpush.bf16.msra.mxu0 0
    %493 = vmatpush.bf16.msra.mxu0 0
    %494 = vmatpush.bf16.msra.mxu0 0
    %495 = vmatpush.bf16.msra.mxu0 %v436
    %496 = vmatpush.bf16.msra.mxu0 %v432
    %497 = vmatmul.bf16.gmra.mxu0 %v449
    %v498 = vpop.f32.mrf.mxu0
    %v499 = vadd.f32 %v400, %v498
    %v500 = vpop.f32.mrf.mxu0
    %v501 = vadd.f32 %v400, %v500
    %502 = vmatmul.bf16.gmra.mxu0 %v452
    %v503 = vpop.f32.mrf.mxu0
    %v504 = vadd.f32 %v400, %v503
    %v505 = vpop.f32.mrf.mxu0
    %v506 = vadd.f32 %v400, %v505
    %507 = vmatmul.bf16.gmra.mxu0 %v455
    %v508 = vpop.f32.mrf.mxu0
    %v509 = vadd.f32 %v400, %v508
    %v510 = vpop.f32.mrf.mxu0
    %v511 = vadd.f32 %v400, %v510
    %512 = vmatmul.bf16.gmra.mxu0 %v458
    %v513 = vpop.f32.mrf.mxu0
    %v514 = vadd.f32 %v400, %v513
    %v515 = vpop.f32.mrf.mxu0
    %v516 = vadd.f32 %v400, %v515
    %517 = vdwg.mxu0
    %518 = vmatpush.bf16.msra.mxu0 0
    %519 = vmatpush.bf16.msra.mxu0 0
    %520 = vmatpush.bf16.msra.mxu0 0
    %521 = vmatpush.bf16.msra.mxu0 0
    %522 = vmatpush.bf16.msra.mxu0 0
    %523 = vmatpush.bf16.msra.mxu0 0
    %524 = vmatpush.bf16.msra.mxu0 %v437
    %525 = vmatpush.bf16.msra.mxu0 %v433
    %526 = vmatmul.bf16.gmra.mxu0 %v449
    %v527 = vpop.f32.mrf.mxu0
    %v528 = vadd.f32 %v401, %v527
    %v529 = vpop.f32.mrf.mxu0
    %v530 = vadd.f32 %v401, %v529
    %531 = vmatmul.bf16.gmra.mxu0 %v452
    %v532 = vpop.f32.mrf.mxu0
    %v533 = vadd.f32 %v401, %v532
    %v534 = vpop.f32.mrf.mxu0
    %v535 = vadd.f32 %v401, %v534
    %536 = vmatmul.bf16.gmra.mxu0 %v455
    %v537 = vpop.f32.mrf.mxu0
    %v538 = vadd.f32 %v401, %v537
    %v539 = vpop.f32.mrf.mxu0
    %v540 = vadd.f32 %v401, %v539
    %541 = vmatmul.bf16.gmra.mxu0 %v458
    %v542 = vpop.f32.mrf.mxu0
    %v543 = vadd.f32 %v401, %v542
    %v544 = vpop.f32.mrf.mxu0
    %v545 = vadd.f32 %v401, %v544
    %546 = vdwg.mxu0
    %547 = vmatpush.bf16.msra.mxu0 0
    %548 = vmatpush.bf16.msra.mxu0 0
    %549 = vmatpush.bf16.msra.mxu0 0
    %550 = vmatpush.bf16.msra.mxu0 0
    %551 = vmatpush.bf16.msra.mxu0 0
    %552 = vmatpush.bf16.msra.mxu0 0
    %553 = vmatpush.bf16.msra.mxu0 %v438
    %554 = vmatpush.bf16.msra.mxu0 %v434
    %555 = vmatmul.bf16.gmra.mxu0 %v449
    %v556 = vpop.f32.mrf.mxu0
    %v557 = vadd.f32 %v402, %v556
    %v558 = vpop.f32.mrf.mxu0
    %v559 = vadd.f32 %v402, %v558
    %560 = vmatmul.bf16.gmra.mxu0 %v452
    %v561 = vpop.f32.mrf.mxu0
    %v562 = vadd.f32 %v402, %v561
    %v563 = vpop.f32.mrf.mxu0
    %v564 = vadd.f32 %v402, %v563
    %565 = vmatmul.bf16.gmra.mxu0 %v455
    %v566 = vpop.f32.mrf.mxu0
    %v567 = vadd.f32 %v402, %v566
    %v568 = vpop.f32.mrf.mxu0
    %v569 = vadd.f32 %v402, %v568
    %570 = vmatmul.bf16.gmra.mxu0 %v458
    %v571 = vpop.f32.mrf.mxu0
    %v572 = vadd.f32 %v402, %v571
    %v573 = vpop.f32.mrf.mxu0
    %v574 = vadd.f32 %v402, %v573
    %575 = vdwg.mxu0
    %v576 = vpack.c.bf16 %v472, %v470
    %v577 = vpack.c.bf16 %v477, %v475
    %v578 = vpack.c.bf16 %v482, %v480
    %v579 = vpack.c.bf16 %v487, %v485
    %v580 = vpack.c.bf16 %v501, %v499
    %v581 = vpack.c.bf16 %v506, %v504
    %v582 = vpack.c.bf16 %v511, %v509
    %v583 = vpack.c.bf16 %v516, %v514
    %584 = vmatpush.bf16.xpose.msra.mxu0 0
    %585 = vmatpush.bf16.xpose.msra.mxu0 0
    %586 = vmatpush.bf16.xpose.msra.mxu0 0
    %587 = vmatpush.bf16.xpose.msra.mxu0 0
    %588 = vmatpush.bf16.xpose.msra.mxu0 %v583
    %589 = vmatpush.bf16.xpose.msra.mxu0 %v582
    %590 = vmatpush.bf16.xpose.msra.mxu0 %v581
    %591 = vmatpush.bf16.xpose.msra.mxu0 %v580
    %592 = vmatmul.bf16.gmra.mxu0 %v576
    %v593 = vpop.f32.mrf.mxu0
    %v594 = vadd.f32 0.0, %v593
    %v595 = vpop.f32.mrf.mxu0
    %v596 = vadd.f32 0.0, %v595
    %597 = vmatmul.bf16.gmra.mxu0 %v577
    %v598 = vpop.f32.mrf.mxu0
    %v599 = vadd.f32 0.0, %v598
    %v600 = vpop.f32.mrf.mxu0
    %v601 = vadd.f32 0.0, %v600
    %602 = vmatmul.bf16.gmra.mxu0 %v578
    %v603 = vpop.f32.mrf.mxu0
    %v604 = vadd.f32 0.0, %v603
    %v605 = vpop.f32.mrf.mxu0
    %v606 = vadd.f32 0.0, %v605
    %607 = vmatmul.bf16.gmra.mxu0 %v579
    %v608 = vpop.f32.mrf.mxu0
    %v609 = vadd.f32 0.0, %v608
    %v610 = vpop.f32.mrf.mxu0
    %v611 = vadd.f32 0.0, %v610
    %612 = vdwg.mxu0
    %v613 = vmul.f32 %v594, 0.125
    %v614 = vmul.f32 %v596, 0.125
    %v615 = vmul.f32 %v599, 0.125
    %v616 = vmul.f32 %v601, 0.125
    %v617 = vmul.f32 %v604, 0.125
    %v618 = vmul.f32 %v606, 0.125
    %v619 = vmul.f32 %v609, 0.125
    %v620 = vmul.f32 %v611, 0.125
    %v621 = vsel %vm314, %v613, -1e+30
    %v622 = vsel %vm315, %v614, -1e+30
    %v623 = vsel %vm316, %v615, -1e+30
    %v624 = vsel %vm317, %v616, -1e+30
    %v625 = vsel %vm318, %v617, -1e+30
    %v626 = vsel %vm319, %v618, -1e+30
    %v627 = vsel %vm320, %v619, -1e+30
    %v628 = vsel %vm321, %v620, -1e+30
    %vm629 = vcmask 523264
    %v630 = vsel %vm629, %v621, -inf
    %631 = vmax.xlane.f32.xlu0 %v630
    %v632 = vpop.xlane.xlu0 %631
    %v633 = vsel %vm629, %v622, -inf
    %634 = vmax.xlane.f32.xlu0 %v633
    %v635 = vpop.xlane.xlu0 %634
    %v636 = vsel %vm629, %v623, -inf
    %637 = vmax.xlane.f32.xlu0 %v636
    %v638 = vpop.xlane.xlu0 %637
    %v639 = vsel %vm629, %v624, -inf
    %640 = vmax.xlane.f32.xlu0 %v639
    %v641 = vpop.xlane.xlu0 %640
    %v642 = vsel %vm629, %v625, -inf
    %643 = vmax.xlane.f32.xlu0 %v642
    %v644 = vpop.xlane.xlu0 %643
    %v645 = vsel %vm629, %v626, -inf
    %646 = vmax.xlane.f32.xlu0 %v645
    %v647 = vpop.xlane.xlu0 %646
    %v648 = vsel %vm629, %v627, -inf
    %649 = vmax.xlane.f32.xlu0 %v648
    %v650 = vpop.xlane.xlu0 %649
    %v651 = vsel %vm629, %v628, -inf
    %652 = vmax.xlane.f32.xlu0 %v651
    %v653 = vpop.xlane.xlu0 %652
    %v654 = vsub.f32 %v621, %v632
    %v655 = vsub.f32 %v622, %v635
    %v656 = vsub.f32 %v623, %v638
    %v657 = vsub.f32 %v624, %v641
    %v658 = vsub.f32 %v625, %v644
    %v659 = vsub.f32 %v626, %v647
    %v660 = vsub.f32 %v627, %v650
    %v661 = vsub.f32 %v628, %v653
    %v662 = vmul.f32 %v654, 1.442695
    %v663 = vpow.pop %v662
    %v664 = vmul.f32 %v655, 1.442695
    %v665 = vpow.pop %v664
    %v666 = vmul.f32 %v656, 1.442695
    %v667 = vpow.pop %v666
    %v668 = vmul.f32 %v657, 1.442695
    %v669 = vpow.pop %v668
    %v670 = vmul.f32 %v658, 1.442695
    %v671 = vpow.pop %v670
    %v672 = vmul.f32 %v659, 1.442695
    %v673 = vpow.pop %v672
    %v674 = vmul.f32 %v660, 1.442695
    %v675 = vpow.pop %v674
    %v676 = vmul.f32 %v661, 1.442695
    %v677 = vpow.pop %v676
    %v678 = vmul.f32 %v295, %v663
    %v679 = vmul.f32 %v297, %v665
    %v680 = vmul.f32 %v300, %v667
    %v681 = vmul.f32 %v302, %v669
    %v682 = vmul.f32 %v305, %v671
    %v683 = vmul.f32 %v307, %v673
    %v684 = vmul.f32 %v310, %v675
    %v685 = vmul.f32 %v312, %v677
    %v686 = vsel %vm629, %v678, 0.0
    %687 = vadd.xlane.f32.xlu0 %v686
    %v688 = vpop.xlane.xlu0 %687
    %v689 = vsel %vm629, %v679, 0.0
    %690 = vadd.xlane.f32.xlu0 %v689
    %v691 = vpop.xlane.xlu0 %690
    %v692 = vsel %vm629, %v680, 0.0
    %693 = vadd.xlane.f32.xlu0 %v692
    %v694 = vpop.xlane.xlu0 %693
    %v695 = vsel %vm629, %v681, 0.0
    %696 = vadd.xlane.f32.xlu0 %v695
    %v697 = vpop.xlane.xlu0 %696
    %v698 = vsel %vm629, %v682, 0.0
    %699 = vadd.xlane.f32.xlu0 %v698
    %v700 = vpop.xlane.xlu0 %699
    %v701 = vsel %vm629, %v683, 0.0
    %702 = vadd.xlane.f32.xlu0 %v701
    %v703 = vpop.xlane.xlu0 %702
    %v704 = vsel %vm629, %v684, 0.0
    %705 = vadd.xlane.f32.xlu0 %v704
    %v706 = vpop.xlane.xlu0 %705
    %v707 = vsel %vm629, %v685, 0.0
    %708 = vadd.xlane.f32.xlu0 %v707
    %v709 = vpop.xlane.xlu0 %708
    %v710 = vpack.c.bf16 %v679, %v678
    %v711 = vpack.c.bf16 %v681, %v680
    %v712 = vpack.c.bf16 %v683, %v682
    %v713 = vpack.c.bf16 %v685, %v684
    %v714 = vpack.c.bf16 %v530, %v528
    %v715 = vpack.c.bf16 %v535, %v533
    %v716 = vpack.c.bf16 %v540, %v538
    %v717 = vpack.c.bf16 %v545, %v543
    %v719 = vsel %vm629, %v710, 0
    %v722 = vsel %vm629, %v711, 0
    %v725 = vsel %vm629, %v712, 0
    %v728 = vsel %vm629, %v713, 0
    %730 = vmatpush.bf16.msra.mxu0 0
    %731 = vmatpush.bf16.msra.mxu0 0
    %732 = vmatpush.bf16.msra.mxu0 0
    %733 = vmatpush.bf16.msra.mxu0 0
    %734 = vmatpush.bf16.msra.mxu0 %v717
    %735 = vmatpush.bf16.msra.mxu0 %v716
    %736 = vmatpush.bf16.msra.mxu0 %v715
    %737 = vmatpush.bf16.msra.mxu0 %v714
    %738 = vmatmul.bf16.gmra.mxu0 %v719
    %v739 = vpop.f32.mrf.mxu0
    %v740 = vadd.f32 0.0, %v739
    %v741 = vpop.f32.mrf.mxu0
    %v742 = vadd.f32 0.0, %v741
    %743 = vmatmul.bf16.gmra.mxu0 %v722
    %v744 = vpop.f32.mrf.mxu0
    %v745 = vadd.f32 0.0, %v744
    %v746 = vpop.f32.mrf.mxu0
    %v747 = vadd.f32 0.0, %v746
    %748 = vmatmul.bf16.gmra.mxu0 %v725
    %v749 = vpop.f32.mrf.mxu0
    %v750 = vadd.f32 0.0, %v749
    %v751 = vpop.f32.mrf.mxu0
    %v752 = vadd.f32 0.0, %v751
    %753 = vmatmul.bf16.gmra.mxu0 %v728
    %v754 = vpop.f32.mrf.mxu0
    %v755 = vadd.f32 0.0, %v754
    %v756 = vpop.f32.mrf.mxu0
    %v757 = vadd.f32 0.0, %v756
    %758 = vdwg.mxu0
    %v759 = vrcp.pop %v688
    %v760 = vrcp.pop %v691
    %v761 = vrcp.pop %v694
    %v762 = vrcp.pop %v697
    %v763 = vrcp.pop %v700
    %v764 = vrcp.pop %v703
    %v765 = vrcp.pop %v706
    %v766 = vrcp.pop %v709
    %v767 = vmul.f32 %v740, %v759
    %v768 = vmul.f32 %v742, %v760
    %v769 = vmul.f32 %v745, %v761
    %v770 = vmul.f32 %v747, %v762
    %v771 = vmul.f32 %v750, %v763
    %v772 = vmul.f32 %v752, %v764
    %v773 = vmul.f32 %v755, %v765
    %v774 = vmul.f32 %v757, %v766
    %v775 = vadd.f32 %v767, %v557
    %v776 = vadd.f32 %v768, %v559
    %v777 = vadd.f32 %v769, %v562
    %v778 = vadd.f32 %v770, %v564
    %v779 = vadd.f32 %v771, %v567
    %v780 = vadd.f32 %v772, %v569
    %v781 = vadd.f32 %v773, %v572
    %v782 = vadd.f32 %v774, %v574
    %v783 = vmul.f32 %v775, %v775
    %v784 = vmul.f32 %v776, %v776
    %v785 = vmul.f32 %v777, %v777
    %v786 = vmul.f32 %v778, %v778
    %v787 = vmul.f32 %v779, %v779
    %v788 = vmul.f32 %v780, %v780
    %v789 = vmul.f32 %v781, %v781
    %v790 = vmul.f32 %v782, %v782
    %v792 = vsel %vm629, 0.015625, 0
    %794 = vmatpush.msra.mxu0 0.0
    %795 = vmatpush.msra.mxu0 0.0
    %796 = vmatpush.msra.mxu0 0.0
    %797 = vmatpush.msra.mxu0 0.0
    %798 = vmatpush.msra.mxu0 0.0
    %799 = vmatpush.msra.mxu0 0.0
    %800 = vmatpush.msra.mxu0 0.0
    %801 = vmatpush.msra.mxu0 0.0
    %802 = vmatpush.msra.mxu0 %v782
    %803 = vmatpush.msra.mxu0 %v781
    %804 = vmatpush.msra.mxu0 %v780
    %805 = vmatpush.msra.mxu0 %v779
    %806 = vmatpush.msra.mxu0 %v778
    %807 = vmatpush.msra.mxu0 %v777
    %808 = vmatpush.msra.mxu0 %v776
    %809 = vmatpush.msra.mxu0 %v775
    %810 = vmatmul.f32.gmra.mxu0 %v792
    %v811 = vpop.f32.mrf.mxu0
    %v812 = vadd.f32 0.0, %v811
    %813 = vdwg.mxu0
    %814 = vmatpush.msra.mxu0 0.0
    %815 = vmatpush.msra.mxu0 0.0
    %816 = vmatpush.msra.mxu0 0.0
    %817 = vmatpush.msra.mxu0 0.0
    %818 = vmatpush.msra.mxu0 0.0
    %819 = vmatpush.msra.mxu0 0.0
    %820 = vmatpush.msra.mxu0 0.0
    %821 = vmatpush.msra.mxu0 0.0
    %822 = vmatpush.msra.mxu0 %v790
    %823 = vmatpush.msra.mxu0 %v789
    %824 = vmatpush.msra.mxu0 %v788
    %825 = vmatpush.msra.mxu0 %v787
    %826 = vmatpush.msra.mxu0 %v786
    %827 = vmatpush.msra.mxu0 %v785
    %828 = vmatpush.msra.mxu0 %v784
    %829 = vmatpush.msra.mxu0 %v783
    %830 = vmatmul.f32.gmra.mxu0 %v792
    %v831 = vpop.f32.mrf.mxu0
    %v832 = vadd.f32 0.0, %v831
    %833 = vdwg.mxu0
    %v834 = vmul.f32 %v812, %v812
    %v835 = vsub.f32 %v832, %v834
    %v836 = vmax.f32 %v835, 0.0
    %v837 = vld [vmem:[#allocation6] sm:$0x1]
    %v838 = vperm.slane %v812, 0
    %v839 = vsub.f32 %v775, %v838
    %v840 = vsub.f32 %v776, %v838
    %v841 = vsub.f32 %v777, %v838
    %v842 = vsub.f32 %v778, %v838
    %v843 = vsub.f32 %v779, %v838
    %v844 = vsub.f32 %v780, %v838
    %v845 = vsub.f32 %v781, %v838
    %v846 = vsub.f32 %v782, %v838
    %v848 = vperm.slane %v837, 0
    %v850 = vmul.f32 %v848, %v839
    %v851 = vmul.f32 %v848, %v840
    %v852 = vmul.f32 %v848, %v841
    %v853 = vmul.f32 %v848, %v842
    %v854 = vmul.f32 %v848, %v843
    %v855 = vmul.f32 %v848, %v844
    %v856 = vmul.f32 %v848, %v845
    %v857 = vmul.f32 %v848, %v846
    %v858 = vadd.f32 %v836, 1e-05
    %v859 = vrsqrt.pop %v858
    %v860 = vmul.f32 %v859, %v858
    %v861 = vmul.f32 %v860, %v859
    %v862 = vmul.f32 0.5, %v861
    %v863 = vsub.f32 1.5, %v862
    %v864 = vmul.f32 %v859, %v863
    %vm865 = vweird.f32 %v858
    %vm866 = vweird.f32 %v859
    %vm867 = vmor %vm865, %vm866
    %v868 = vsel %vm867, %v859, %v864
    %v869 = vperm.slane %v868, 0
    %v870 = vmul.f32 %v850, %v869
    %v871 = vmul.f32 %v851, %v869
    %v872 = vmul.f32 %v852, %v869
    %v873 = vmul.f32 %v853, %v869
    %v874 = vmul.f32 %v854, %v869
    %v875 = vmul.f32 %v855, %v869
    %v876 = vmul.f32 %v856, %v869
    %v877 = vmul.f32 %v857, %v869
    %v878 = vld [vmem:[#allocation7] sm:$0x1]
    %v880 = vperm.slane %v878, 0
    %v882 = vadd.f32 %v870, %v880
    %v883 = vadd.f32 %v871, %v880
    %v884 = vadd.f32 %v872, %v880
    %v885 = vadd.f32 %v873, %v880
    %v886 = vadd.f32 %v874, %v880
    %v887 = vadd.f32 %v875, %v880
    %v888 = vadd.f32 %v876, %v880
    %v889 = vadd.f32 %v877, %v880
    %v890 = vmax.f32 %v882, 0.0
    %v891 = vmax.f32 %v883, 0.0
    %v892 = vmax.f32 %v884, 0.0
    %v893 = vmax.f32 %v885, 0.0
    %v894 = vmax.f32 %v886, 0.0
    %v895 = vmax.f32 %v887, 0.0
    %v896 = vmax.f32 %v888, 0.0
    %v897 = vmax.f32 %v889, 0.0
    %s898 = scalar_lea.vmem %s8, 4
    %v899 = vld [vmem:[%s898] sm:$0xf]
    %v900 = vpack.c.bf16 %v891, %v890
    %v901 = vpack.c.bf16 %v893, %v892
    %v902 = vpack.c.bf16 %v895, %v894
    %v903 = vpack.c.bf16 %v897, %v896
    %v904 = vld [vmem:[%s6] sm:$0xff]
    %v905 = vld [vmem:[%s6 + $0x8] sm:$0xff]
    %v906 = vld [vmem:[%s6 + $0x10] sm:$0xff]
    %v907 = vld [vmem:[%s6 + $0x18] sm:$0xff]
    %v908 = vld [vmem:[%s6 + $0x20] sm:$0xff]
    %v909 = vld [vmem:[%s6 + $0x28] sm:$0xff]
    %v910 = vld [vmem:[%s6 + $0x30] sm:$0xff]
    %v911 = vld [vmem:[%s6 + $0x38] sm:$0xff]
    %v912 = vld [vmem:[%s6 + $0x40] sm:$0xff]
    %v913 = vld [vmem:[%s6 + $0x48] sm:$0xff]
    %v914 = vld [vmem:[%s6 + $0x50] sm:$0xff]
    %v915 = vld [vmem:[%s6 + $0x58] sm:$0xff]
    %v916 = vld [vmem:[%s6 + $0x60] sm:$0xff]
    %v917 = vld [vmem:[%s6 + $0x68] sm:$0xff]
    %v918 = vld [vmem:[%s6 + $0x70] sm:$0xff]
    %v919 = vld [vmem:[%s6 + $0x78] sm:$0xff]
    %v921 = vperm.slane %v899, 0
    %v922 = vperm.slane %v899, 1
    %v923 = vperm.slane %v899, 2
    %v924 = vperm.slane %v899, 3
    %v945 = vunpack.c.l.b16 %v904
    %v946 = vunpack.c.h.b16 %v904
    %v947 = vunpack.c.l.b16 %v905
    %v948 = vunpack.c.h.b16 %v905
    %v949 = vunpack.c.l.b16 %v906
    %v950 = vunpack.c.h.b16 %v906
    %v951 = vunpack.c.l.b16 %v907
    %v952 = vunpack.c.h.b16 %v907
    %v953 = vunpack.c.l.b16 %v908
    %v954 = vunpack.c.h.b16 %v908
    %v955 = vunpack.c.l.b16 %v909
    %v956 = vunpack.c.h.b16 %v909
    %v957 = vunpack.c.l.b16 %v910
    %v958 = vunpack.c.h.b16 %v910
    %v959 = vunpack.c.l.b16 %v911
    %v960 = vunpack.c.h.b16 %v911
    %v961 = vunpack.c.l.b16 %v912
    %v962 = vunpack.c.h.b16 %v912
    %v963 = vunpack.c.l.b16 %v913
    %v964 = vunpack.c.h.b16 %v913
    %v965 = vunpack.c.l.b16 %v914
    %v966 = vunpack.c.h.b16 %v914
    %v967 = vunpack.c.l.b16 %v915
    %v968 = vunpack.c.h.b16 %v915
    %v969 = vunpack.c.l.b16 %v916
    %v970 = vunpack.c.h.b16 %v916
    %v971 = vunpack.c.l.b16 %v917
    %v972 = vunpack.c.h.b16 %v917
    %v973 = vunpack.c.l.b16 %v918
    %v974 = vunpack.c.h.b16 %v918
    %v975 = vunpack.c.l.b16 %v919
    %v976 = vunpack.c.h.b16 %v919
    %v977 = vpack.c.b16 %v949, %v945
    %v978 = vpack.c.b16 %v950, %v946
    %v979 = vpack.c.b16 %v951, %v947
    %v980 = vpack.c.b16 %v952, %v948
    %v981 = vpack.c.b16 %v957, %v953
    %v982 = vpack.c.b16 %v958, %v954
    %v983 = vpack.c.b16 %v959, %v955
    %v984 = vpack.c.b16 %v960, %v956
    %v985 = vpack.c.b16 %v965, %v961
    %v986 = vpack.c.b16 %v966, %v962
    %v987 = vpack.c.b16 %v967, %v963
    %v988 = vpack.c.b16 %v968, %v964
    %v989 = vpack.c.b16 %v973, %v969
    %v990 = vpack.c.b16 %v974, %v970
    %v991 = vpack.c.b16 %v975, %v971
    %v992 = vpack.c.b16 %v976, %v972
    %v1010 = vsel %vm629, %v900, 0
    %v1013 = vsel %vm629, %v901, 0
    %v1016 = vsel %vm629, %v902, 0
    %v1019 = vsel %vm629, %v903, 0
    %1021 = vmatpush.bf16.msra.mxu0 0
    %1022 = vmatpush.bf16.msra.mxu0 0
    %1023 = vmatpush.bf16.msra.mxu0 0
    %1024 = vmatpush.bf16.msra.mxu0 0
    %1025 = vmatpush.bf16.msra.mxu0 %v989
    %1026 = vmatpush.bf16.msra.mxu0 %v985
    %1027 = vmatpush.bf16.msra.mxu0 %v981
    %1028 = vmatpush.bf16.msra.mxu0 %v977
    %1029 = vmatmul.bf16.gmra.mxu0 %v1010
    %v1030 = vpop.f32.mrf.mxu0
    %v1031 = vadd.f32 %v921, %v1030
    %v1032 = vpop.f32.mrf.mxu0
    %v1033 = vadd.f32 %v921, %v1032
    %1034 = vmatmul.bf16.gmra.mxu0 %v1013
    %v1035 = vpop.f32.mrf.mxu0
    %v1036 = vadd.f32 %v921, %v1035
    %v1037 = vpop.f32.mrf.mxu0
    %v1038 = vadd.f32 %v921, %v1037
    %1039 = vmatmul.bf16.gmra.mxu0 %v1016
    %v1040 = vpop.f32.mrf.mxu0
    %v1041 = vadd.f32 %v921, %v1040
    %v1042 = vpop.f32.mrf.mxu0
    %v1043 = vadd.f32 %v921, %v1042
    %1044 = vmatmul.bf16.gmra.mxu0 %v1019
    %v1045 = vpop.f32.mrf.mxu0
    %v1046 = vadd.f32 %v921, %v1045
    %v1047 = vpop.f32.mrf.mxu0
    %v1048 = vadd.f32 %v921, %v1047
    %1049 = vdwg.mxu0
    %1050 = vmatpush.bf16.msra.mxu0 0
    %1051 = vmatpush.bf16.msra.mxu0 0
    %1052 = vmatpush.bf16.msra.mxu0 0
    %1053 = vmatpush.bf16.msra.mxu0 0
    %1054 = vmatpush.bf16.msra.mxu0 %v990
    %1055 = vmatpush.bf16.msra.mxu0 %v986
    %1056 = vmatpush.bf16.msra.mxu0 %v982
    %1057 = vmatpush.bf16.msra.mxu0 %v978
    %1058 = vmatmul.bf16.gmra.mxu0 %v1010
    %v1059 = vpop.f32.mrf.mxu0
    %v1060 = vadd.f32 %v922, %v1059
    %v1061 = vpop.f32.mrf.mxu0
    %v1062 = vadd.f32 %v922, %v1061
    %1063 = vmatmul.bf16.gmra.mxu0 %v1013
    %v1064 = vpop.f32.mrf.mxu0
    %v1065 = vadd.f32 %v922, %v1064
    %v1066 = vpop.f32.mrf.mxu0
    %v1067 = vadd.f32 %v922, %v1066
    %1068 = vmatmul.bf16.gmra.mxu0 %v1016
    %v1069 = vpop.f32.mrf.mxu0
    %v1070 = vadd.f32 %v922, %v1069
    %v1071 = vpop.f32.mrf.mxu0
    %v1072 = vadd.f32 %v922, %v1071
    %1073 = vmatmul.bf16.gmra.mxu0 %v1019
    %v1074 = vpop.f32.mrf.mxu0
    %v1075 = vadd.f32 %v922, %v1074
    %v1076 = vpop.f32.mrf.mxu0
    %v1077 = vadd.f32 %v922, %v1076
    %1078 = vdwg.mxu0
    %1079 = vmatpush.bf16.msra.mxu0 0
    %1080 = vmatpush.bf16.msra.mxu0 0
    %1081 = vmatpush.bf16.msra.mxu0 0
    %1082 = vmatpush.bf16.msra.mxu0 0
    %1083 = vmatpush.bf16.msra.mxu0 %v991
    %1084 = vmatpush.bf16.msra.mxu0 %v987
    %1085 = vmatpush.bf16.msra.mxu0 %v983
    %1086 = vmatpush.bf16.msra.mxu0 %v979
    %1087 = vmatmul.bf16.gmra.mxu0 %v1010
    %v1088 = vpop.f32.mrf.mxu0
    %v1089 = vadd.f32 %v923, %v1088
    %v1090 = vpop.f32.mrf.mxu0
    %v1091 = vadd.f32 %v923, %v1090
    %1092 = vmatmul.bf16.gmra.mxu0 %v1013
    %v1093 = vpop.f32.mrf.mxu0
    %v1094 = vadd.f32 %v923, %v1093
    %v1095 = vpop.f32.mrf.mxu0
    %v1096 = vadd.f32 %v923, %v1095
    %1097 = vmatmul.bf16.gmra.mxu0 %v1016
    %v1098 = vpop.f32.mrf.mxu0
    %v1099 = vadd.f32 %v923, %v1098
    %v1100 = vpop.f32.mrf.mxu0
    %v1101 = vadd.f32 %v923, %v1100
    %1102 = vmatmul.bf16.gmra.mxu0 %v1019
    %v1103 = vpop.f32.mrf.mxu0
    %v1104 = vadd.f32 %v923, %v1103
    %v1105 = vpop.f32.mrf.mxu0
    %v1106 = vadd.f32 %v923, %v1105
    %1107 = vdwg.mxu0
    %1108 = vmatpush.bf16.msra.mxu0 0
    %1109 = vmatpush.bf16.msra.mxu0 0
    %1110 = vmatpush.bf16.msra.mxu0 0
    %1111 = vmatpush.bf16.msra.mxu0 0
    %1112 = vmatpush.bf16.msra.mxu0 %v992
    %1113 = vmatpush.bf16.msra.mxu0 %v988
    %1114 = vmatpush.bf16.msra.mxu0 %v984
    %1115 = vmatpush.bf16.msra.mxu0 %v980
    %1116 = vmatmul.bf16.gmra.mxu0 %v1010
    %v1117 = vpop.f32.mrf.mxu0
    %v1118 = vadd.f32 %v924, %v1117
    %v1119 = vpop.f32.mrf.mxu0
    %v1120 = vadd.f32 %v924, %v1119
    %1121 = vmatmul.bf16.gmra.mxu0 %v1013
    %v1122 = vpop.f32.mrf.mxu0
    %v1123 = vadd.f32 %v924, %v1122
    %v1124 = vpop.f32.mrf.mxu0
    %v1125 = vadd.f32 %v924, %v1124
    %1126 = vmatmul.bf16.gmra.mxu0 %v1016
    %v1127 = vpop.f32.mrf.mxu0
    %v1128 = vadd.f32 %v924, %v1127
    %v1129 = vpop.f32.mrf.mxu0
    %v1130 = vadd.f32 %v924, %v1129
    %1131 = vmatmul.bf16.gmra.mxu0 %v1019
    %v1132 = vpop.f32.mrf.mxu0
    %v1133 = vadd.f32 %v924, %v1132
    %v1134 = vpop.f32.mrf.mxu0
    %v1135 = vadd.f32 %v924, %v1134
    %1136 = vdwg.mxu0
    %v1137 = vpack.c.bf16 %v1033, %v1031
    %v1138 = vpack.c.bf16 %v1038, %v1036
    %v1139 = vpack.c.bf16 %v1043, %v1041
    %v1140 = vpack.c.bf16 %v1048, %v1046
    %v1141 = vpack.c.bf16 %v1062, %v1060
    %v1142 = vpack.c.bf16 %v1067, %v1065
    %v1143 = vpack.c.bf16 %v1072, %v1070
    %v1144 = vpack.c.bf16 %v1077, %v1075
    %1145 = vmatpush.bf16.xpose.msra.mxu0 0
    %1146 = vmatpush.bf16.xpose.msra.mxu0 0
    %1147 = vmatpush.bf16.xpose.msra.mxu0 0
    %1148 = vmatpush.bf16.xpose.msra.mxu0 0
    %1149 = vmatpush.bf16.xpose.msra.mxu0 %v1144
    %1150 = vmatpush.bf16.xpose.msra.mxu0 %v1143
    %1151 = vmatpush.bf16.xpose.msra.mxu0 %v1142
    %1152 = vmatpush.bf16.xpose.msra.mxu0 %v1141
    %1153 = vmatmul.bf16.gmra.mxu0 %v1137
    %v1154 = vpop.f32.mrf.mxu0
    %v1155 = vadd.f32 0.0, %v1154
    %v1156 = vpop.f32.mrf.mxu0
    %v1157 = vadd.f32 0.0, %v1156
    %1158 = vmatmul.bf16.gmra.mxu0 %v1138
    %v1159 = vpop.f32.mrf.mxu0
    %v1160 = vadd.f32 0.0, %v1159
    %v1161 = vpop.f32.mrf.mxu0
    %v1162 = vadd.f32 0.0, %v1161
    %1163 = vmatmul.bf16.gmra.mxu0 %v1139
    %v1164 = vpop.f32.mrf.mxu0
    %v1165 = vadd.f32 0.0, %v1164
    %v1166 = vpop.f32.mrf.mxu0
    %v1167 = vadd.f32 0.0, %v1166
    %1168 = vmatmul.bf16.gmra.mxu0 %v1140
    %v1169 = vpop.f32.mrf.mxu0
    %v1170 = vadd.f32 0.0, %v1169
    %v1171 = vpop.f32.mrf.mxu0
    %v1172 = vadd.f32 0.0, %v1171
    %1173 = vdwg.mxu0
    %v1174 = vmul.f32 %v1155, 0.17677669
    %v1175 = vmul.f32 %v1157, 0.17677669
    %v1176 = vmul.f32 %v1160, 0.17677669
    %v1177 = vmul.f32 %v1162, 0.17677669
    %v1178 = vmul.f32 %v1165, 0.17677669
    %v1179 = vmul.f32 %v1167, 0.17677669
    %v1180 = vmul.f32 %v1170, 0.17677669
    %v1181 = vmul.f32 %v1172, 0.17677669
    %v1182 = vsel %vm314, %v1174, -1e+30
    %v1183 = vsel %vm315, %v1175, -1e+30
    %v1184 = vsel %vm316, %v1176, -1e+30
    %v1185 = vsel %vm317, %v1177, -1e+30
    %v1186 = vsel %vm318, %v1178, -1e+30
    %v1187 = vsel %vm319, %v1179, -1e+30
    %v1188 = vsel %vm320, %v1180, -1e+30
    %v1189 = vsel %vm321, %v1181, -1e+30
    %v1190 = vsel %vm629, %v1182, -inf
    %1191 = vmax.xlane.f32.xlu0 %v1190
    %v1192 = vpop.xlane.xlu0 %1191
    %v1193 = vsel %vm629, %v1183, -inf
    %1194 = vmax.xlane.f32.xlu0 %v1193
    %v1195 = vpop.xlane.xlu0 %1194
    %v1196 = vsel %vm629, %v1184, -inf
    %1197 = vmax.xlane.f32.xlu0 %v1196
    %v1198 = vpop.xlane.xlu0 %1197
    %v1199 = vsel %vm629, %v1185, -inf
    %1200 = vmax.xlane.f32.xlu0 %v1199
    %v1201 = vpop.xlane.xlu0 %1200
    %v1202 = vsel %vm629, %v1186, -inf
    %1203 = vmax.xlane.f32.xlu0 %v1202
    %v1204 = vpop.xlane.xlu0 %1203
    %v1205 = vsel %vm629, %v1187, -inf
    %1206 = vmax.xlane.f32.xlu0 %v1205
    %v1207 = vpop.xlane.xlu0 %1206
    %v1208 = vsel %vm629, %v1188, -inf
    %1209 = vmax.xlane.f32.xlu0 %v1208
    %v1210 = vpop.xlane.xlu0 %1209
    %v1211 = vsel %vm629, %v1189, -inf
    %1212 = vmax.xlane.f32.xlu0 %v1211
    %v1213 = vpop.xlane.xlu0 %1212
    %v1214 = vsub.f32 %v1182, %v1192
    %v1215 = vsub.f32 %v1183, %v1195
    %v1216 = vsub.f32 %v1184, %v1198
    %v1217 = vsub.f32 %v1185, %v1201
    %v1218 = vsub.f32 %v1186, %v1204
    %v1219 = vsub.f32 %v1187, %v1207
    %v1220 = vsub.f32 %v1188, %v1210
    %v1221 = vsub.f32 %v1189, %v1213
    %v1222 = vmul.f32 %v1214, 1.442695
    %v1223 = vpow.pop %v1222
    %v1224 = vmul.f32 %v1215, 1.442695
    %v1225 = vpow.pop %v1224
    %v1226 = vmul.f32 %v1216, 1.442695
    %v1227 = vpow.pop %v1226
    %v1228 = vmul.f32 %v1217, 1.442695
    %v1229 = vpow.pop %v1228
    %v1230 = vmul.f32 %v1218, 1.442695
    %v1231 = vpow.pop %v1230
    %v1232 = vmul.f32 %v1219, 1.442695
    %v1233 = vpow.pop %v1232
    %v1234 = vmul.f32 %v1220, 1.442695
    %v1235 = vpow.pop %v1234
    %v1236 = vmul.f32 %v1221, 1.442695
    %v1237 = vpow.pop %v1236
    %v1238 = vmul.f32 %v295, %v1223
    %v1239 = vmul.f32 %v297, %v1225
    %v1240 = vmul.f32 %v300, %v1227
    %v1241 = vmul.f32 %v302, %v1229
    %v1242 = vmul.f32 %v305, %v1231
    %v1243 = vmul.f32 %v307, %v1233
    %v1244 = vmul.f32 %v310, %v1235
    %v1245 = vmul.f32 %v312, %v1237
    %v1246 = vsel %vm629, %v1238, 0.0
    %1247 = vadd.xlane.f32.xlu0 %v1246
    %v1248 = vpop.xlane.xlu0 %1247
    %v1249 = vsel %vm629, %v1239, 0.0
    %1250 = vadd.xlane.f32.xlu0 %v1249
    %v1251 = vpop.xlane.xlu0 %1250
    %v1252 = vsel %vm629, %v1240, 0.0
    %1253 = vadd.xlane.f32.xlu0 %v1252
    %v1254 = vpop.xlane.xlu0 %1253
    %v1255 = vsel %vm629, %v1241, 0.0
    %1256 = vadd.xlane.f32.xlu0 %v1255
    %v1257 = vpop.xlane.xlu0 %1256
    %v1258 = vsel %vm629, %v1242, 0.0
    %1259 = vadd.xlane.f32.xlu0 %v1258
    %v1260 = vpop.xlane.xlu0 %1259
    %v1261 = vsel %vm629, %v1243, 0.0
    %1262 = vadd.xlane.f32.xlu0 %v1261
    %v1263 = vpop.xlane.xlu0 %1262
    %v1264 = vsel %vm629, %v1244, 0.0
    %1265 = vadd.xlane.f32.xlu0 %v1264
    %v1266 = vpop.xlane.xlu0 %1265
    %v1267 = vsel %vm629, %v1245, 0.0
    %1268 = vadd.xlane.f32.xlu0 %v1267
    %v1269 = vpop.xlane.xlu0 %1268
    %v1270 = vpack.c.bf16 %v1239, %v1238
    %v1271 = vpack.c.bf16 %v1241, %v1240
    %v1272 = vpack.c.bf16 %v1243, %v1242
    %v1273 = vpack.c.bf16 %v1245, %v1244
    %v1274 = vpack.c.bf16 %v1091, %v1089
    %v1275 = vpack.c.bf16 %v1096, %v1094
    %v1276 = vpack.c.bf16 %v1101, %v1099
    %v1277 = vpack.c.bf16 %v1106, %v1104
    %v1279 = vsel %vm629, %v1270, 0
    %v1282 = vsel %vm629, %v1271, 0
    %v1285 = vsel %vm629, %v1272, 0
    %v1288 = vsel %vm629, %v1273, 0
    %1290 = vmatpush.bf16.msra.mxu0 0
    %1291 = vmatpush.bf16.msra.mxu0 0
    %1292 = vmatpush.bf16.msra.mxu0 0
    %1293 = vmatpush.bf16.msra.mxu0 0
    %1294 = vmatpush.bf16.msra.mxu0 %v1277
    %1295 = vmatpush.bf16.msra.mxu0 %v1276
    %1296 = vmatpush.bf16.msra.mxu0 %v1275
    %1297 = vmatpush.bf16.msra.mxu0 %v1274
    %1298 = vmatmul.bf16.gmra.mxu0 %v1279
    %v1299 = vpop.f32.mrf.mxu0
    %v1300 = vadd.f32 0.0, %v1299
    %v1301 = vpop.f32.mrf.mxu0
    %v1302 = vadd.f32 0.0, %v1301
    %1303 = vmatmul.bf16.gmra.mxu0 %v1282
    %v1304 = vpop.f32.mrf.mxu0
    %v1305 = vadd.f32 0.0, %v1304
    %v1306 = vpop.f32.mrf.mxu0
    %v1307 = vadd.f32 0.0, %v1306
    %1308 = vmatmul.bf16.gmra.mxu0 %v1285
    %v1309 = vpop.f32.mrf.mxu0
    %v1310 = vadd.f32 0.0, %v1309
    %v1311 = vpop.f32.mrf.mxu0
    %v1312 = vadd.f32 0.0, %v1311
    %1313 = vmatmul.bf16.gmra.mxu0 %v1288
    %v1314 = vpop.f32.mrf.mxu0
    %v1315 = vadd.f32 0.0, %v1314
    %v1316 = vpop.f32.mrf.mxu0
    %v1317 = vadd.f32 0.0, %v1316
    %1318 = vdwg.mxu0
    %v1319 = vrcp.pop %v1248
    %v1320 = vrcp.pop %v1251
    %v1321 = vrcp.pop %v1254
    %v1322 = vrcp.pop %v1257
    %v1323 = vrcp.pop %v1260
    %v1324 = vrcp.pop %v1263
    %v1325 = vrcp.pop %v1266
    %v1326 = vrcp.pop %v1269
    %v1327 = vmul.f32 %v1300, %v1319
    %v1328 = vmul.f32 %v1302, %v1320
    %v1329 = vmul.f32 %v1305, %v1321
    %v1330 = vmul.f32 %v1307, %v1322
    %v1331 = vmul.f32 %v1310, %v1323
    %v1332 = vmul.f32 %v1312, %v1324
    %v1333 = vmul.f32 %v1315, %v1325
    %v1334 = vmul.f32 %v1317, %v1326
    %v1335 = vadd.f32 %v1327, %v1118
    %v1336 = vadd.f32 %v1328, %v1120
    %v1337 = vadd.f32 %v1329, %v1123
    %v1338 = vadd.f32 %v1330, %v1125
    %v1339 = vadd.f32 %v1331, %v1128
    %v1340 = vadd.f32 %v1332, %v1130
    %v1341 = vadd.f32 %v1333, %v1133
    %v1342 = vadd.f32 %v1334, %v1135
    %v1343 = vmul.f32 %v1335, %v1335
    %v1344 = vmul.f32 %v1336, %v1336
    %v1345 = vmul.f32 %v1337, %v1337
    %v1346 = vmul.f32 %v1338, %v1338
    %v1347 = vmul.f32 %v1339, %v1339
    %v1348 = vmul.f32 %v1340, %v1340
    %v1349 = vmul.f32 %v1341, %v1341
    %v1350 = vmul.f32 %v1342, %v1342
    %1351 = vmatpush.msra.mxu0 0.0
    %1352 = vmatpush.msra.mxu0 0.0
    %1353 = vmatpush.msra.mxu0 0.0
    %1354 = vmatpush.msra.mxu0 0.0
    %1355 = vmatpush.msra.mxu0 0.0
    %1356 = vmatpush.msra.mxu0 0.0
    %1357 = vmatpush.msra.mxu0 0.0
    %1358 = vmatpush.msra.mxu0 0.0
    %1359 = vmatpush.msra.mxu0 %v1342
    %1360 = vmatpush.msra.mxu0 %v1341
    %1361 = vmatpush.msra.mxu0 %v1340
    %1362 = vmatpush.msra.mxu0 %v1339
    %1363 = vmatpush.msra.mxu0 %v1338
    %1364 = vmatpush.msra.mxu0 %v1337
    %1365 = vmatpush.msra.mxu0 %v1336
    %1366 = vmatpush.msra.mxu0 %v1335
    %1367 = vmatmul.f32.gmra.mxu0 %v792
    %v1368 = vpop.f32.mrf.mxu0
    %v1369 = vadd.f32 0.0, %v1368
    %1370 = vdwg.mxu0
    %1371 = vmatpush.msra.mxu0 0.0
    %1372 = vmatpush.msra.mxu0 0.0
    %1373 = vmatpush.msra.mxu0 0.0
    %1374 = vmatpush.msra.mxu0 0.0
    %1375 = vmatpush.msra.mxu0 0.0
    %1376 = vmatpush.msra.mxu0 0.0
    %1377 = vmatpush.msra.mxu0 0.0
    %1378 = vmatpush.msra.mxu0 0.0
    %1379 = vmatpush.msra.mxu0 %v1350
    %1380 = vmatpush.msra.mxu0 %v1349
    %1381 = vmatpush.msra.mxu0 %v1348
    %1382 = vmatpush.msra.mxu0 %v1347
    %1383 = vmatpush.msra.mxu0 %v1346
    %1384 = vmatpush.msra.mxu0 %v1345
    %1385 = vmatpush.msra.mxu0 %v1344
    %1386 = vmatpush.msra.mxu0 %v1343
    %1387 = vmatmul.f32.gmra.mxu0 %v792
    %v1388 = vpop.f32.mrf.mxu0
    %v1389 = vadd.f32 0.0, %v1388
    %1390 = vdwg.mxu0
    %v1391 = vmul.f32 %v1369, %v1369
    %v1392 = vsub.f32 %v1389, %v1391
    %v1393 = vmax.f32 %v1392, 0.0
    %s1394 = scalar_lea.vmem [#allocation6], 1
    %v1395 = vld [vmem:[%s1394] sm:$0x1]
    %v1396 = vperm.slane %v1369, 0
    %v1397 = vsub.f32 %v1335, %v1396
    %v1398 = vsub.f32 %v1336, %v1396
    %v1399 = vsub.f32 %v1337, %v1396
    %v1400 = vsub.f32 %v1338, %v1396
    %v1401 = vsub.f32 %v1339, %v1396
    %v1402 = vsub.f32 %v1340, %v1396
    %v1403 = vsub.f32 %v1341, %v1396
    %v1404 = vsub.f32 %v1342, %v1396
    %v1406 = vperm.slane %v1395, 0
    %v1408 = vmul.f32 %v1406, %v1397
    %v1409 = vmul.f32 %v1406, %v1398
    %v1410 = vmul.f32 %v1406, %v1399
    %v1411 = vmul.f32 %v1406, %v1400
    %v1412 = vmul.f32 %v1406, %v1401
    %v1413 = vmul.f32 %v1406, %v1402
    %v1414 = vmul.f32 %v1406, %v1403
    %v1415 = vmul.f32 %v1406, %v1404
    %v1416 = vadd.f32 %v1393, 1e-05
    %v1417 = vrsqrt.pop %v1416
    %v1418 = vmul.f32 %v1417, %v1416
    %v1419 = vmul.f32 %v1418, %v1417
    %v1420 = vmul.f32 0.5, %v1419
    %v1421 = vsub.f32 1.5, %v1420
    %v1422 = vmul.f32 %v1417, %v1421
    %vm1423 = vweird.f32 %v1416
    %vm1424 = vweird.f32 %v1417
    %vm1425 = vmor %vm1423, %vm1424
    %v1426 = vsel %vm1425, %v1417, %v1422
    %v1427 = vperm.slane %v1426, 0
    %v1428 = vmul.f32 %v1408, %v1427
    %v1429 = vmul.f32 %v1409, %v1427
    %v1430 = vmul.f32 %v1410, %v1427
    %v1431 = vmul.f32 %v1411, %v1427
    %v1432 = vmul.f32 %v1412, %v1427
    %v1433 = vmul.f32 %v1413, %v1427
    %v1434 = vmul.f32 %v1414, %v1427
    %v1435 = vmul.f32 %v1415, %v1427
    %s1436 = scalar_lea.vmem [#allocation7], 1
    %v1437 = vld [vmem:[%s1436] sm:$0x1]
    %v1439 = vperm.slane %v1437, 0
    %v1441 = vadd.f32 %v1428, %v1439
    %v1442 = vadd.f32 %v1429, %v1439
    %v1443 = vadd.f32 %v1430, %v1439
    %v1444 = vadd.f32 %v1431, %v1439
    %v1445 = vadd.f32 %v1432, %v1439
    %v1446 = vadd.f32 %v1433, %v1439
    %v1447 = vadd.f32 %v1434, %v1439
    %v1448 = vadd.f32 %v1435, %v1439
    %v1449 = vmax.f32 %v1441, 0.0
    %v1450 = vmax.f32 %v1442, 0.0
    %v1451 = vmax.f32 %v1443, 0.0
    %v1452 = vmax.f32 %v1444, 0.0
    %v1453 = vmax.f32 %v1445, 0.0
    %v1454 = vmax.f32 %v1446, 0.0
    %v1455 = vmax.f32 %v1447, 0.0
    %v1456 = vmax.f32 %v1448, 0.0
    %s1457 = scalar_lea.vmem %s8, 8
    %v1458 = vld [vmem:[%s1457] sm:$0xf]
    %v1459 = vpack.c.bf16 %v1450, %v1449
    %v1460 = vpack.c.bf16 %v1452, %v1451
    %v1461 = vpack.c.bf16 %v1454, %v1453
    %v1462 = vpack.c.bf16 %v1456, %v1455
    %v1463 = vld [vmem:[#allocation4] sm:$0xff]
    %v1464 = vld [vmem:[#allocation4 + $0x8] sm:$0xff]
    %v1465 = vld [vmem:[#allocation4 + $0x10] sm:$0xff]
    %v1466 = vld [vmem:[#allocation4 + $0x18] sm:$0xff]
    %v1467 = vld [vmem:[#allocation4 + $0x20] sm:$0xff]
    %v1468 = vld [vmem:[#allocation4 + $0x28] sm:$0xff]
    %v1469 = vld [vmem:[#allocation4 + $0x30] sm:$0xff]
    %v1470 = vld [vmem:[#allocation4 + $0x38] sm:$0xff]
    %v1472 = vperm.slane %v1458, 0
    %v1473 = vperm.slane %v1458, 1
    %v1474 = vperm.slane %v1458, 2
    %v1475 = vperm.slane %v1458, 3
    %v1488 = vunpack.c.l.b16 %v1463
    %v1489 = vunpack.c.h.b16 %v1463
    %v1490 = vunpack.c.l.b16 %v1464
    %v1491 = vunpack.c.h.b16 %v1464
    %v1492 = vunpack.c.l.b16 %v1465
    %v1493 = vunpack.c.h.b16 %v1465
    %v1494 = vunpack.c.l.b16 %v1466
    %v1495 = vunpack.c.h.b16 %v1466
    %v1496 = vunpack.c.l.b16 %v1467
    %v1497 = vunpack.c.h.b16 %v1467
    %v1498 = vunpack.c.l.b16 %v1468
    %v1499 = vunpack.c.h.b16 %v1468
    %v1500 = vunpack.c.l.b16 %v1469
    %v1501 = vunpack.c.h.b16 %v1469
    %v1502 = vunpack.c.l.b16 %v1470
    %v1503 = vunpack.c.h.b16 %v1470
    %v1504 = vpack.c.b16 %v1492, %v1488
    %v1505 = vpack.c.b16 %v1493, %v1489
    %v1506 = vpack.c.b16 %v1494, %v1490
    %v1507 = vpack.c.b16 %v1495, %v1491
    %v1508 = vpack.c.b16 %v1500, %v1496
    %v1509 = vpack.c.b16 %v1501, %v1497
    %v1510 = vpack.c.b16 %v1502, %v1498
    %v1511 = vpack.c.b16 %v1503, %v1499
    %v1521 = vsel %vm447, %v1459, 0
    %v1524 = vsel %vm447, %v1460, 0
    %v1527 = vsel %vm447, %v1461, 0
    %v1530 = vsel %vm447, %v1462, 0
    %1532 = vmatpush.bf16.msra.mxu0 0
    %1533 = vmatpush.bf16.msra.mxu0 0
    %1534 = vmatpush.bf16.msra.mxu0 0
    %1535 = vmatpush.bf16.msra.mxu0 0
    %1536 = vmatpush.bf16.msra.mxu0 0
    %1537 = vmatpush.bf16.msra.mxu0 0
    %1538 = vmatpush.bf16.msra.mxu0 %v1508
    %1539 = vmatpush.bf16.msra.mxu0 %v1504
    %1540 = vmatmul.bf16.gmra.mxu0 %v1521
    %v1541 = vpop.f32.mrf.mxu0
    %v1542 = vadd.f32 %v1472, %v1541
    %v1543 = vpop.f32.mrf.mxu0
    %v1544 = vadd.f32 %v1472, %v1543
    %1545 = vmatmul.bf16.gmra.mxu0 %v1524
    %v1546 = vpop.f32.mrf.mxu0
    %v1547 = vadd.f32 %v1472, %v1546
    %v1548 = vpop.f32.mrf.mxu0
    %v1549 = vadd.f32 %v1472, %v1548
    %1550 = vmatmul.bf16.gmra.mxu0 %v1527
    %v1551 = vpop.f32.mrf.mxu0
    %v1552 = vadd.f32 %v1472, %v1551
    %v1553 = vpop.f32.mrf.mxu0
    %v1554 = vadd.f32 %v1472, %v1553
    %1555 = vmatmul.bf16.gmra.mxu0 %v1530
    %v1556 = vpop.f32.mrf.mxu0
    %v1557 = vadd.f32 %v1472, %v1556
    %v1558 = vpop.f32.mrf.mxu0
    %v1559 = vadd.f32 %v1472, %v1558
    %1560 = vdwg.mxu0
    %1561 = vmatpush.bf16.msra.mxu0 0
    %1562 = vmatpush.bf16.msra.mxu0 0
    %1563 = vmatpush.bf16.msra.mxu0 0
    %1564 = vmatpush.bf16.msra.mxu0 0
    %1565 = vmatpush.bf16.msra.mxu0 0
    %1566 = vmatpush.bf16.msra.mxu0 0
    %1567 = vmatpush.bf16.msra.mxu0 %v1509
    %1568 = vmatpush.bf16.msra.mxu0 %v1505
    %1569 = vmatmul.bf16.gmra.mxu0 %v1521
    %v1570 = vpop.f32.mrf.mxu0
    %v1571 = vadd.f32 %v1473, %v1570
    %v1572 = vpop.f32.mrf.mxu0
    %v1573 = vadd.f32 %v1473, %v1572
    %1574 = vmatmul.bf16.gmra.mxu0 %v1524
    %v1575 = vpop.f32.mrf.mxu0
    %v1576 = vadd.f32 %v1473, %v1575
    %v1577 = vpop.f32.mrf.mxu0
    %v1578 = vadd.f32 %v1473, %v1577
    %1579 = vmatmul.bf16.gmra.mxu0 %v1527
    %v1580 = vpop.f32.mrf.mxu0
    %v1581 = vadd.f32 %v1473, %v1580
    %v1582 = vpop.f32.mrf.mxu0
    %v1583 = vadd.f32 %v1473, %v1582
    %1584 = vmatmul.bf16.gmra.mxu0 %v1530
    %v1585 = vpop.f32.mrf.mxu0
    %v1586 = vadd.f32 %v1473, %v1585
    %v1587 = vpop.f32.mrf.mxu0
    %v1588 = vadd.f32 %v1473, %v1587
    %1589 = vdwg.mxu0
    %1590 = vmatpush.bf16.msra.mxu0 0
    %1591 = vmatpush.bf16.msra.mxu0 0
    %1592 = vmatpush.bf16.msra.mxu0 0
    %1593 = vmatpush.bf16.msra.mxu0 0
    %1594 = vmatpush.bf16.msra.mxu0 0
    %1595 = vmatpush.bf16.msra.mxu0 0
    %1596 = vmatpush.bf16.msra.mxu0 %v1510
    %1597 = vmatpush.bf16.msra.mxu0 %v1506
    %1598 = vmatmul.bf16.gmra.mxu0 %v1521
    %v1599 = vpop.f32.mrf.mxu0
    %v1600 = vadd.f32 %v1474, %v1599
    %v1601 = vpop.f32.mrf.mxu0
    %v1602 = vadd.f32 %v1474, %v1601
    %1603 = vmatmul.bf16.gmra.mxu0 %v1524
    %v1604 = vpop.f32.mrf.mxu0
    %v1605 = vadd.f32 %v1474, %v1604
    %v1606 = vpop.f32.mrf.mxu0
    %v1607 = vadd.f32 %v1474, %v1606
    %1608 = vmatmul.bf16.gmra.mxu0 %v1527
    %v1609 = vpop.f32.mrf.mxu0
    %v1610 = vadd.f32 %v1474, %v1609
    %v1611 = vpop.f32.mrf.mxu0
    %v1612 = vadd.f32 %v1474, %v1611
    %1613 = vmatmul.bf16.gmra.mxu0 %v1530
    %v1614 = vpop.f32.mrf.mxu0
    %v1615 = vadd.f32 %v1474, %v1614
    %v1616 = vpop.f32.mrf.mxu0
    %v1617 = vadd.f32 %v1474, %v1616
    %1618 = vdwg.mxu0
    %1619 = vmatpush.bf16.msra.mxu0 0
    %1620 = vmatpush.bf16.msra.mxu0 0
    %1621 = vmatpush.bf16.msra.mxu0 0
    %1622 = vmatpush.bf16.msra.mxu0 0
    %1623 = vmatpush.bf16.msra.mxu0 0
    %1624 = vmatpush.bf16.msra.mxu0 0
    %1625 = vmatpush.bf16.msra.mxu0 %v1511
    %1626 = vmatpush.bf16.msra.mxu0 %v1507
    %1627 = vmatmul.bf16.gmra.mxu0 %v1521
    %v1628 = vpop.f32.mrf.mxu0
    %v1629 = vadd.f32 %v1475, %v1628
    %v1630 = vpop.f32.mrf.mxu0
    %v1631 = vadd.f32 %v1475, %v1630
    %1632 = vmatmul.bf16.gmra.mxu0 %v1524
    %v1633 = vpop.f32.mrf.mxu0
    %v1634 = vadd.f32 %v1475, %v1633
    %v1635 = vpop.f32.mrf.mxu0
    %v1636 = vadd.f32 %v1475, %v1635
    %1637 = vmatmul.bf16.gmra.mxu0 %v1527
    %v1638 = vpop.f32.mrf.mxu0
    %v1639 = vadd.f32 %v1475, %v1638
    %v1640 = vpop.f32.mrf.mxu0
    %v1641 = vadd.f32 %v1475, %v1640
    %1642 = vmatmul.bf16.gmra.mxu0 %v1530
    %v1643 = vpop.f32.mrf.mxu0
    %v1644 = vadd.f32 %v1475, %v1643
    %v1645 = vpop.f32.mrf.mxu0
    %v1646 = vadd.f32 %v1475, %v1645
    %1647 = vdwg.mxu0
    %v1648 = vpack.c.bf16 %v1544, %v1542
    %v1649 = vpack.c.bf16 %v1549, %v1547
    %v1650 = vpack.c.bf16 %v1554, %v1552
    %v1651 = vpack.c.bf16 %v1559, %v1557
    %v1652 = vpack.c.bf16 %v1573, %v1571
    %v1653 = vpack.c.bf16 %v1578, %v1576
    %v1654 = vpack.c.bf16 %v1583, %v1581
    %v1655 = vpack.c.bf16 %v1588, %v1586
    %1656 = vmatpush.bf16.xpose.msra.mxu0 0
    %1657 = vmatpush.bf16.xpose.msra.mxu0 0
    %1658 = vmatpush.bf16.xpose.msra.mxu0 0
    %1659 = vmatpush.bf16.xpose.msra.mxu0 0
    %1660 = vmatpush.bf16.xpose.msra.mxu0 %v1655
    %1661 = vmatpush.bf16.xpose.msra.mxu0 %v1654
    %1662 = vmatpush.bf16.xpose.msra.mxu0 %v1653
    %1663 = vmatpush.bf16.xpose.msra.mxu0 %v1652
    %1664 = vmatmul.bf16.gmra.mxu0 %v1648
    %v1665 = vpop.f32.mrf.mxu0
    %v1666 = vadd.f32 0.0, %v1665
    %v1667 = vpop.f32.mrf.mxu0
    %v1668 = vadd.f32 0.0, %v1667
    %1669 = vmatmul.bf16.gmra.mxu0 %v1649
    %v1670 = vpop.f32.mrf.mxu0
    %v1671 = vadd.f32 0.0, %v1670
    %v1672 = vpop.f32.mrf.mxu0
    %v1673 = vadd.f32 0.0, %v1672
    %1674 = vmatmul.bf16.gmra.mxu0 %v1650
    %v1675 = vpop.f32.mrf.mxu0
    %v1676 = vadd.f32 0.0, %v1675
    %v1677 = vpop.f32.mrf.mxu0
    %v1678 = vadd.f32 0.0, %v1677
    %1679 = vmatmul.bf16.gmra.mxu0 %v1651
    %v1680 = vpop.f32.mrf.mxu0
    %v1681 = vadd.f32 0.0, %v1680
    %v1682 = vpop.f32.mrf.mxu0
    %v1683 = vadd.f32 0.0, %v1682
    %1684 = vdwg.mxu0
    %v1685 = vmul.f32 %v1666, 0.17677669
    %v1686 = vmul.f32 %v1668, 0.17677669
    %v1687 = vmul.f32 %v1671, 0.17677669
    %v1688 = vmul.f32 %v1673, 0.17677669
    %v1689 = vmul.f32 %v1676, 0.17677669
    %v1690 = vmul.f32 %v1678, 0.17677669
    %v1691 = vmul.f32 %v1681, 0.17677669
    %v1692 = vmul.f32 %v1683, 0.17677669
    %v1693 = vsel %vm314, %v1685, -1e+30
    %v1694 = vsel %vm315, %v1686, -1e+30
    %v1695 = vsel %vm316, %v1687, -1e+30
    %v1696 = vsel %vm317, %v1688, -1e+30
    %v1697 = vsel %vm318, %v1689, -1e+30
    %v1698 = vsel %vm319, %v1690, -1e+30
    %v1699 = vsel %vm320, %v1691, -1e+30
    %v1700 = vsel %vm321, %v1692, -1e+30
    %v1701 = vsel %vm629, %v1693, -inf
    %1702 = vmax.xlane.f32.xlu0 %v1701
    %v1703 = vpop.xlane.xlu0 %1702
    %v1704 = vsel %vm629, %v1694, -inf
    %1705 = vmax.xlane.f32.xlu0 %v1704
    %v1706 = vpop.xlane.xlu0 %1705
    %v1707 = vsel %vm629, %v1695, -inf
    %1708 = vmax.xlane.f32.xlu0 %v1707
    %v1709 = vpop.xlane.xlu0 %1708
    %v1710 = vsel %vm629, %v1696, -inf
    %1711 = vmax.xlane.f32.xlu0 %v1710
    %v1712 = vpop.xlane.xlu0 %1711
    %v1713 = vsel %vm629, %v1697, -inf
    %1714 = vmax.xlane.f32.xlu0 %v1713
    %v1715 = vpop.xlane.xlu0 %1714
    %v1716 = vsel %vm629, %v1698, -inf
    %1717 = vmax.xlane.f32.xlu0 %v1716
    %v1718 = vpop.xlane.xlu0 %1717
    %v1719 = vsel %vm629, %v1699, -inf
    %1720 = vmax.xlane.f32.xlu0 %v1719
    %v1721 = vpop.xlane.xlu0 %1720
    %v1722 = vsel %vm629, %v1700, -inf
    %1723 = vmax.xlane.f32.xlu0 %v1722
    %v1724 = vpop.xlane.xlu0 %1723
    %v1725 = vsub.f32 %v1693, %v1703
    %v1726 = vsub.f32 %v1694, %v1706
    %v1727 = vsub.f32 %v1695, %v1709
    %v1728 = vsub.f32 %v1696, %v1712
    %v1729 = vsub.f32 %v1697, %v1715
    %v1730 = vsub.f32 %v1698, %v1718
    %v1731 = vsub.f32 %v1699, %v1721
    %v1732 = vsub.f32 %v1700, %v1724
    %v1733 = vmul.f32 %v1725, 1.442695
    %v1734 = vpow.pop %v1733
    %v1735 = vmul.f32 %v1726, 1.442695
    %v1736 = vpow.pop %v1735
    %v1737 = vmul.f32 %v1727, 1.442695
    %v1738 = vpow.pop %v1737
    %v1739 = vmul.f32 %v1728, 1.442695
    %v1740 = vpow.pop %v1739
    %v1741 = vmul.f32 %v1729, 1.442695
    %v1742 = vpow.pop %v1741
    %v1743 = vmul.f32 %v1730, 1.442695
    %v1744 = vpow.pop %v1743
    %v1745 = vmul.f32 %v1731, 1.442695
    %v1746 = vpow.pop %v1745
    %v1747 = vmul.f32 %v1732, 1.442695
    %v1748 = vpow.pop %v1747
    %v1749 = vmul.f32 %v295, %v1734
    %v1750 = vmul.f32 %v297, %v1736
    %v1751 = vmul.f32 %v300, %v1738
    %v1752 = vmul.f32 %v302, %v1740
    %v1753 = vmul.f32 %v305, %v1742
    %v1754 = vmul.f32 %v307, %v1744
    %v1755 = vmul.f32 %v310, %v1746
    %v1756 = vmul.f32 %v312, %v1748
    %v1757 = vsel %vm629, %v1749, 0.0
    %1758 = vadd.xlane.f32.xlu0 %v1757
    %v1759 = vpop.xlane.xlu0 %1758
    %v1760 = vsel %vm629, %v1750, 0.0
    %1761 = vadd.xlane.f32.xlu0 %v1760
    %v1762 = vpop.xlane.xlu0 %1761
    %v1763 = vsel %vm629, %v1751, 0.0
    %1764 = vadd.xlane.f32.xlu0 %v1763
    %v1765 = vpop.xlane.xlu0 %1764
    %v1766 = vsel %vm629, %v1752, 0.0
    %1767 = vadd.xlane.f32.xlu0 %v1766
    %v1768 = vpop.xlane.xlu0 %1767
    %v1769 = vsel %vm629, %v1753, 0.0
    %1770 = vadd.xlane.f32.xlu0 %v1769
    %v1771 = vpop.xlane.xlu0 %1770
    %v1772 = vsel %vm629, %v1754, 0.0
    %1773 = vadd.xlane.f32.xlu0 %v1772
    %v1774 = vpop.xlane.xlu0 %1773
    %v1775 = vsel %vm629, %v1755, 0.0
    %1776 = vadd.xlane.f32.xlu0 %v1775
    %v1777 = vpop.xlane.xlu0 %1776
    %v1778 = vsel %vm629, %v1756, 0.0
    %1779 = vadd.xlane.f32.xlu0 %v1778
    %v1780 = vpop.xlane.xlu0 %1779
    %v1781 = vpack.c.bf16 %v1750, %v1749
    %v1782 = vpack.c.bf16 %v1752, %v1751
    %v1783 = vpack.c.bf16 %v1754, %v1753
    %v1784 = vpack.c.bf16 %v1756, %v1755
    %v1785 = vpack.c.bf16 %v1602, %v1600
    %v1786 = vpack.c.bf16 %v1607, %v1605
    %v1787 = vpack.c.bf16 %v1612, %v1610
    %v1788 = vpack.c.bf16 %v1617, %v1615
    %v1790 = vsel %vm629, %v1781, 0
    %v1793 = vsel %vm629, %v1782, 0
    %v1796 = vsel %vm629, %v1783, 0
    %v1799 = vsel %vm629, %v1784, 0
    %1801 = vmatpush.bf16.msra.mxu0 0
    %1802 = vmatpush.bf16.msra.mxu0 0
    %1803 = vmatpush.bf16.msra.mxu0 0
    %1804 = vmatpush.bf16.msra.mxu0 0
    %1805 = vmatpush.bf16.msra.mxu0 %v1788
    %1806 = vmatpush.bf16.msra.mxu0 %v1787
    %1807 = vmatpush.bf16.msra.mxu0 %v1786
    %1808 = vmatpush.bf16.msra.mxu0 %v1785
    %1809 = vmatmul.bf16.gmra.mxu0 %v1790
    %v1810 = vpop.f32.mrf.mxu0
    %v1811 = vadd.f32 0.0, %v1810
    %v1812 = vpop.f32.mrf.mxu0
    %v1813 = vadd.f32 0.0, %v1812
    %1814 = vmatmul.bf16.gmra.mxu0 %v1793
    %v1815 = vpop.f32.mrf.mxu0
    %v1816 = vadd.f32 0.0, %v1815
    %v1817 = vpop.f32.mrf.mxu0
    %v1818 = vadd.f32 0.0, %v1817
    %1819 = vmatmul.bf16.gmra.mxu0 %v1796
    %v1820 = vpop.f32.mrf.mxu0
    %v1821 = vadd.f32 0.0, %v1820
    %v1822 = vpop.f32.mrf.mxu0
    %v1823 = vadd.f32 0.0, %v1822
    %1824 = vmatmul.bf16.gmra.mxu0 %v1799
    %v1825 = vpop.f32.mrf.mxu0
    %v1826 = vadd.f32 0.0, %v1825
    %v1827 = vpop.f32.mrf.mxu0
    %v1828 = vadd.f32 0.0, %v1827
    %1829 = vdwg.mxu0
    %v1830 = vrcp.pop %v1759
    %v1831 = vrcp.pop %v1762
    %v1832 = vrcp.pop %v1765
    %v1833 = vrcp.pop %v1768
    %v1834 = vrcp.pop %v1771
    %v1835 = vrcp.pop %v1774
    %v1836 = vrcp.pop %v1777
    %v1837 = vrcp.pop %v1780
    %v1838 = vmul.f32 %v1811, %v1830
    %v1839 = vmul.f32 %v1813, %v1831
    %v1840 = vmul.f32 %v1816, %v1832
    %v1841 = vmul.f32 %v1818, %v1833
    %v1842 = vmul.f32 %v1821, %v1834
    %v1843 = vmul.f32 %v1823, %v1835
    %v1844 = vmul.f32 %v1826, %v1836
    %v1845 = vmul.f32 %v1828, %v1837
    %v1846 = vadd.f32 %v1838, %v1629
    %v1847 = vadd.f32 %v1839, %v1631
    %v1848 = vadd.f32 %v1840, %v1634
    %v1849 = vadd.f32 %v1841, %v1636
    %v1850 = vadd.f32 %v1842, %v1639
    %v1851 = vadd.f32 %v1843, %v1641
    %v1852 = vadd.f32 %v1844, %v1644
    %v1853 = vadd.f32 %v1845, %v1646
    %1854 = vst [vmem:[%s11] sm:$0xff] %v1846
    %1855 = vst [vmem:[%s11 + $0x8] sm:$0xff] %v1847
    %1856 = vst [vmem:[%s11 + $0x10] sm:$0xff] %v1848
    %1857 = vst [vmem:[%s11 + $0x18] sm:$0xff] %v1849
    %1858 = vst [vmem:[%s11 + $0x20] sm:$0xff] %v1850
    %1859 = vst [vmem:[%s11 + $0x28] sm:$0xff] %v1851
    %1860 = vst [vmem:[%s11 + $0x30] sm:$0xff] %v1852
    %1861 = vst [vmem:[%s11 + $0x38] sm:$0xff] %v1853
    // Predicated region
    $region62: #{forward.1} parent=1 // pred_check
      _
    $region63: #{forward.1} parent=1 // pred_check_branch
      %1863 = sbr.rel (0) target = $region65
    $region64: #{forward.1} parent=1 // pred_region
      _
    $region65: #{forward.1} parent=1 // pred_fallthru
      _
    // Predicated region
    $region66: #{forward.1} parent=1 // pred_check
      _
    $region67: #{forward.1} parent=1 // pred_check_branch
      %1865 = sbr.rel (0) target = $region69
    $region68: #{forward.1} parent=1 // pred_region
      _
    $region69: #{forward.1} parent=1 // pred_fallthru
      _
    %1866 = vsyncpa [#allocation3], 1
    %1867 = vsyncpa [#allocation5], 1
    %1868 = vsyncpa [#allocation8], 1

</llo_original>
